<compile_context>
chip_gen: v6e
topology: v6e:2x2x1
jax: 0.10.0
libtpu: 0.0.40
codegen_flags: <defaults>
</compile_context>

<pallas_src>
import functools

import numpy as np

import jax
import jax.numpy as jnp
from jax import lax
from jax.experimental import pallas as pl
from jax.experimental.pallas import tpu as pltpu

K = 7        # conv kernel size
PAD = 3      # reflect padding
LANE = 128   # TPU lane width


# ---------------------------------------------------------------------------
# small helpers
# ---------------------------------------------------------------------------
def _round_up(x, m):
    return (x + m - 1) // m * m


def _largest_divisor(n, cap, multiple_of=1):
    """Largest d <= cap with d | n and multiple_of | d, else None."""
    for d in range(min(n, cap), 0, -1):
        if n % d == 0 and d % multiple_of == 0:
            return d
    return None


def _sublane_multiple(dtype):
    """Native second-to-last-dim tile multiple for the given dtype."""
    return {4: 8, 2: 16, 1: 32}.get(jnp.dtype(dtype).itemsize, 8)


def _vmem_limit(est_bytes):
    """Generation-aware scoped-VMEM request: <=75% of physical, >= the estimate."""
    try:
        phys = int(pltpu.get_tpu_info().vmem_capacity_bytes)
    except Exception:   # conservative default if the query is unavailable
        phys = 64 * 1024 * 1024
    ceiling = phys * 3 // 4
    want = min(max(2 * est_bytes, 32 * 1024 * 1024), ceiling)
    return int(max(want, est_bytes + (4 << 20)))


# ---------------------------------------------------------------------------
# Stage 1: channel mean + max over unpadded x
# ---------------------------------------------------------------------------
def _channel_reduce_kernel(x_ref, o_ref, sum_ref, max_ref, *, inv_c, group):
    # x_ref   : VMEM (1, Ct, Ts, L)   input channel block
    # o_ref   : VMEM (1, 2, Ts, L)    [avg, max] map (resident across the c axis)
    # sum/max : VMEM (Ts, L) f32      running channel sum / max
    c = pl.program_id(2)

    @pl.when(c == 0)
    def _init():
        sum_ref[...] = jnp.zeros_like(sum_ref)
        max_ref[...] = jnp.full_like(max_ref, -jnp.inf)

    ct = x_ref.shape[1]

    def body(g, carry):
        base = g * group
        slabs = [x_ref[0, base + j].astype(jnp.float32) for j in range(group)]
        # pairwise-combine `group` slabs in registers -> one scratch RMW / group
        s = slabs
        while len(s) > 1:
            nxt = [s[i] + s[i + 1] for i in range(0, len(s) - 1, 2)]
            if len(s) % 2:
                nxt.append(s[-1])
            s = nxt
        m = slabs
        while len(m) > 1:
            nxt = [jnp.maximum(m[i], m[i + 1]) for i in range(0, len(m) - 1, 2)]
            if len(m) % 2:
                nxt.append(m[-1])
            m = nxt
        sum_ref[...] = sum_ref[...] + s[0]
        max_ref[...] = jnp.maximum(max_ref[...], m[0])
        return carry

    lax.fori_loop(0, ct // group, body, 0, unroll=True)

    @pl.when(c == pl.num_programs(2) - 1)
    def _finalize():
        o_ref[0, 0] = (sum_ref[...] * inv_c).astype(o_ref.dtype)
        o_ref[0, 1] = max_ref[...].astype(o_ref.dtype)


# ---------------------------------------------------------------------------
# Stage 2: 7x7 conv over the reflect-padded [avg, max] map (halo row tiles)
# ---------------------------------------------------------------------------
def _conv7x7_kernel(w_ref, b_ref, m_ref, o_ref, cs_ref):
    # w_ref : SMEM (98,)              conv weights, index = ch*49 + di*7 + dj
    # b_ref : SMEM (1,)               conv bias
    # m_ref : VMEM (1, 1, 2*halo, Wl) halo row tile of the padded map,
    #                                 channels stacked along the sublane axis
    # o_ref : VMEM (1, 1, Tr, Wo)     lane-dense output tile (Wo = roundup(W,128))
    # cs_ref: VMEM (K-1, Tr, Ws) f32  scratch used to apply the 6 column shifts
    tr = o_ref.shape[2]
    wo = o_ref.shape[3]
    wl = m_ref.shape[3]
    halo = m_ref.shape[2] // 2
    ws = cs_ref.shape[2]

    # 7 per-dj column sums, built from unshifted, lane-aligned row loads only
    # (register-resident: Tr*Wl is capped by the wrapper).
    colsum = [None] * K
    for ch in range(2):
        for di in range(K):
            rows = m_ref[0, 0, pl.ds(ch * halo + di, tr), :]       # (Tr, Wl)
            for dj in range(K):
                t = w_ref[ch * K * K + di * K + dj] * rows
                colsum[dj] = t if colsum[dj] is None else colsum[dj] + t

    # Apply the 6 static column shifts via a small VMEM bounce: write each
    # column sum once, read it back at lane offset dj.  Lanes >= Wl only feed
    # output lanes >= W, which are truncated by the wrapper.
    if ws > wl:
        cs_ref[:, :, pl.ds(wl, ws - wl)] = jnp.zeros(
            (K - 1, tr, ws - wl), jnp.float32)
    for dj in range(1, K):
        cs_ref[dj - 1, :, :wl] = colsum[dj]

    acc = colsum[0][:, :wo]
    for dj in range(1, K):
        acc = acc + cs_ref[dj - 1, :, pl.ds(dj, wo)]

    o_ref[0, 0] = (acc + b_ref[0]).astype(o_ref.dtype)


# ---------------------------------------------------------------------------
# wrapper
# ---------------------------------------------------------------------------
@jax.jit
def _forward(x, weight, bias):
    B, C, H, W = x.shape
    if H <= PAD or W <= PAD:
        raise ValueError("reflect padding requires H > 3 and W > 3")
    itemsize = jnp.dtype(x.dtype).itemsize
    sub_in = _sublane_multiple(x.dtype)

    # ----------------- Stage 1: channel mean + max -----------------
    HW = H * W
    if HW % LANE == 0:
        S, L = HW // LANE, LANE        # lane-dense view (full vregs for small W)
    else:
        S, L = H, W                    # fallback: rows as sublanes, W as lanes
    xr = x.reshape(B, C, S, L)

    budget = 4 * 1024 * 1024           # ~4 MiB input block per grid step
    ts_cap = max(1, budget // (max(1, min(C, 8)) * L * itemsize))
    if B == 1 and S >= 2 * sub_in:
        ts_cap = min(ts_cap, S // 2)   # keep >=2 parallel steps for v7x's 2 TCs
    Ts = _largest_divisor(S, min(S, ts_cap), multiple_of=sub_in) or S
    ct_cap = max(1, budget // (Ts * L * itemsize))
    Ct = _largest_divisor(C, min(C, ct_cap, 128)) or 1
    group = 4 if Ct % 4 == 0 else (2 if Ct % 2 == 0 else 1)

    red_vmem = (2 * Ct * Ts * L * itemsize      # double-buffered input block
                + 2 * 2 * Ts * L * 4            # double-buffered output block
                + 2 * Ts * L * 4)               # sum/max scratch

    reduced = pl.pallas_call(
        functools.partial(_channel_reduce_kernel,
                          inv_c=float(1.0 / C), group=group),
        out_shape=jax.ShapeDtypeStruct((B, 2, S, L), jnp.float32),
        grid_spec=pltpu.PrefetchScalarGridSpec(
            num_scalar_prefetch=0,
            grid=(B, S // Ts, C // Ct),
            in_specs=[pl.BlockSpec((1, Ct, Ts, L), lambda b, s, c: (b, c, s, 0))],
            out_specs=pl.BlockSpec((1, 2, Ts, L), lambda b, s, c: (b, 0, s, 0)),
            scratch_shapes=[pltpu.VMEM((Ts, L), jnp.float32),
                            pltpu.VMEM((Ts, L), jnp.float32)],
        ),
        compiler_params=pltpu.CompilerParams(
            dimension_semantics=("parallel", "parallel", "arbitrary"),
            vmem_limit_bytes=_vmem_limit(red_vmem),
        ),
    )(xr)

    # ------- glue: pad + halo-tile the tiny 2-channel map (cheap XLA) -------
    m = reduced.reshape(B, 2, H, W)
    Wp = W + 2 * PAD
    Wl = _round_up(Wp, LANE)           # lane-padded map width
    Wo = _round_up(W, LANE)            # lane-dense output width
    m_pad = jnp.pad(m, ((0, 0), (0, 0), (PAD, PAD), (PAD, PAD)), mode="reflect")
    m_pad = jnp.pad(m_pad, ((0, 0), (0, 0), (0, 0), (0, Wl - Wp)))   # zeros

    tr_cap = max(8, 4096 // Wl)        # keep the 7 f32 (Tr, Wl) column sums in vregs
    if B == 1 and H >= 16:
        tr_cap = min(tr_cap, H // 2)   # >=2 parallel steps for v7x's 2 TCs
    Tr = _largest_divisor(H, min(H, tr_cap), multiple_of=8) or H
    n_row = H // Tr
    halo = Tr + 2 * PAD

    # Overlapping row windows are materialized once by a cheap XLA gather on
    # the tiny map, so the per-step Stage-2 VMEM block is O(Tr*Wl).
    row_idx = (np.arange(n_row)[:, None] * Tr + np.arange(halo)[None, :]).reshape(-1)
    m_tiles = m_pad[:, :, row_idx, :].reshape(B, 2, n_row, halo, Wl)
    m_tiles = m_tiles.transpose(0, 2, 1, 3, 4).reshape(B, n_row, 2 * halo, Wl)

    w_flat = weight.reshape(2 * K * K).astype(jnp.float32)
    b_vec = bias.reshape(1).astype(jnp.float32)
    Ws = Wo + LANE                     # scratch wide enough for the +6 lane reads

    conv_vmem = (2 * 2 * halo * Wl * 4           # double-buffered map tile
                 + 2 * Tr * Wo * itemsize        # double-buffered output tile
                 + (K - 1) * Tr * Ws * 4)        # column-sum scratch

    out_wide = pl.pallas_call(
        _conv7x7_kernel,
        out_shape=jax.ShapeDtypeStruct((B, 1, H, Wo), x.dtype),
        grid_spec=pltpu.PrefetchScalarGridSpec(
            num_scalar_prefetch=0,
            grid=(B, n_row),
            in_specs=[
                pl.BlockSpec(memory_space=pltpu.MemorySpace.SMEM),   # weights
                pl.BlockSpec(memory_space=pltpu.MemorySpace.SMEM),   # bias
                pl.BlockSpec((1, 1, 2 * halo, Wl), lambda b, r: (b, r, 0, 0)),
            ],
            out_specs=pl.BlockSpec((1, 1, Tr, Wo), lambda b, r: (b, 0, r, 0)),
            scratch_shapes=[pltpu.VMEM((K - 1, Tr, Ws), jnp.float32)],
        ),
        compiler_params=pltpu.CompilerParams(
            dimension_semantics=("parallel", "parallel"),
            vmem_limit_bytes=_vmem_limit(conv_vmem),
        ),
    )(w_flat, b_vec, m_tiles)

    # lane-dense store in the kernel; truncate to W here (cheap XLA slice).
    return out_wide[:, :, :, :W]


def spatial_attention_cga(x, weight, bias):
    """x: (B, C, H, W); weight: (1, 2, 7, 7); bias: (1,). Returns (B, 1, H, W)."""
    return _forward(x, weight, bias)


def _reference(x, weight, bias):
    """Pure-JAX reference matching the PyTorch forward."""
    x_avg = jnp.mean(x, axis=1, keepdims=True)
    x_max = jnp.max(x, axis=1, keepdims=True)
    x2 = jnp.concatenate([x_avg, x_max], axis=1)                 # (B, 2, H, W)
    x2p = jnp.pad(x2, ((0, 0), (0, 0), (PAD, PAD), (PAD, PAD)), mode="reflect")
    y = jax.lax.conv_general_dilated(
        x2p, weight, window_strides=(1, 1), padding="VALID",
        dimension_numbers=("NCHW", "OIHW", "NCHW"))
    return y + bias.reshape(1, 1, 1, 1)


if __name__ == "__main__":
    B, C, H, W = 2, 4, 16, 16
    key = jax.random.PRNGKey(0)
    kx, kw, kb = jax.random.split(key, 3)

    x = jax.random.normal(kx, (B, C, H, W), dtype=jnp.float32)
    # Deterministic synthetic conv parameters (Conv2d(2, 1, 7) shapes).
    weight = jax.random.normal(kw, (1, 2, K, K), dtype=jnp.float32) * 0.1
    bias = jax.random.normal(kb, (1,), dtype=jnp.float32) * 0.1

    out = jax.block_until_ready(spatial_attention_cga(x, weight, bias))

    ref = _reference(x, weight, bias)
    assert out.shape == (B, 1, H, W), out.shape
    err = float(jnp.max(jnp.abs(out - ref)))
    assert jnp.allclose(out, ref, atol=1e-4, rtol=1e-4), err

    print("KERNEL_OK")
</pallas_src>

<mosaic_0001>
module attributes {stable_mosaic.version = 11 : i64} {
  func.func @_channel_reduce_kernel(%arg0: i32, %arg1: i32, %arg2: i32, %arg3: memref<1x4x2x128xf32, #tpu.memory_space<vmem>>, %arg4: memref<1x2x2x128xf32, #tpu.memory_space<vmem>>, %arg5: memref<2x128xf32, #tpu.memory_space<vmem>>, %arg6: memref<2x128xf32, #tpu.memory_space<vmem>>) attributes {dimension_semantics = [#tpu.dimension_semantics<parallel>, #tpu.dimension_semantics<parallel>, #tpu.dimension_semantics<arbitrary>], iteration_bounds = array<i64: 2, 1, 1>, scalar_prefetch = 0 : i64, scratch_operands = 2 : i64, tpu.core_type = #tpu.core_type<tc>, window_params = [{transform_indices = @transform_0, window_bounds = array<i64: 1, 4, 2, 128>}, {transform_indices = @transform_1, window_bounds = array<i64: 1, 2, 2, 128>}]} {
    %c0_i32 = arith.constant 0 : i32
    %0 = arith.cmpi eq, %arg2, %c0_i32 : i32
    %1 = arith.extui %0 : i1 to i32
    %c0_i32_0 = arith.constant 0 : i32
    %2 = arith.cmpi ne, %1, %c0_i32_0 : i32
    scf.if %2 {
      %cst = arith.constant 0.000000e+00 : f32
      %35 = vector.broadcast %cst : f32 to vector<2x128xf32>
      %c0_25 = arith.constant 0 : index
      %c0_26 = arith.constant 0 : index
      %36 = vector.load %arg5[%c0_25, %c0_26] : memref<2x128xf32, #tpu.memory_space<vmem>>, vector<2x128xf32>
      tpu.vector_store %arg5[%c0_25, %c0_26], %35 {strides = array<i32>} : memref<2x128xf32, #tpu.memory_space<vmem>>, vector<2x128xf32>,
      %cst_27 = arith.constant 0xFF800000 : f32
      %37 = vector.broadcast %cst_27 : f32 to vector<2x128xf32>
      %c0_28 = arith.constant 0 : index
      %c0_29 = arith.constant 0 : index
      %38 = vector.load %arg6[%c0_28, %c0_29] : memref<2x128xf32, #tpu.memory_space<vmem>>, vector<2x128xf32>
      tpu.vector_store %arg6[%c0_28, %c0_29], %37 {strides = array<i32>} : memref<2x128xf32, #tpu.memory_space<vmem>>, vector<2x128xf32>,
    } else {
    }
    %c0_i32_1 = arith.constant 0 : i32
    %c4_i32 = arith.constant 4 : i32
    %3 = arith.muli %c0_i32_1, %c4_i32 : i32
    %c0_i32_2 = arith.constant 0 : i32
    %4 = arith.addi %3, %c0_i32_2 : i32
    %c0 = arith.constant 0 : index
    %5 = arith.index_cast %4 : i32 to index
    %c0_3 = arith.constant 0 : index
    %c0_4 = arith.constant 0 : index
    %6 = vector.load %arg3[%c0, %5, %c0_3, %c0_4] : memref<1x4x2x128xf32, #tpu.memory_space<vmem>>, vector<1x1x2x128xf32>
    %7 = vector.shape_cast %6 : vector<1x1x2x128xf32> to vector<2x128xf32>
    %c1_i32 = arith.constant 1 : i32
    %8 = arith.addi %3, %c1_i32 : i32
    %c0_5 = arith.constant 0 : index
    %9 = arith.index_cast %8 : i32 to index
    %c0_6 = arith.constant 0 : index
    %c0_7 = arith.constant 0 : index
    %10 = vector.load %arg3[%c0_5, %9, %c0_6, %c0_7] : memref<1x4x2x128xf32, #tpu.memory_space<vmem>>, vector<1x1x2x128xf32>
    %11 = vector.shape_cast %10 : vector<1x1x2x128xf32> to vector<2x128xf32>
    %c2_i32 = arith.constant 2 : i32
    %12 = arith.addi %3, %c2_i32 : i32
    %c0_8 = arith.constant 0 : index
    %13 = arith.index_cast %12 : i32 to index
    %c0_9 = arith.constant 0 : index
    %c0_10 = arith.constant 0 : index
    %14 = vector.load %arg3[%c0_8, %13, %c0_9, %c0_10] : memref<1x4x2x128xf32, #tpu.memory_space<vmem>>, vector<1x1x2x128xf32>
    %15 = vector.shape_cast %14 : vector<1x1x2x128xf32> to vector<2x128xf32>
    %c3_i32 = arith.constant 3 : i32
    %16 = arith.addi %3, %c3_i32 : i32
    %c0_11 = arith.constant 0 : index
    %17 = arith.index_cast %16 : i32 to index
    %c0_12 = arith.constant 0 : index
    %c0_13 = arith.constant 0 : index
    %18 = vector.load %arg3[%c0_11, %17, %c0_12, %c0_13] : memref<1x4x2x128xf32, #tpu.memory_space<vmem>>, vector<1x1x2x128xf32>
    %19 = vector.shape_cast %18 : vector<1x1x2x128xf32> to vector<2x128xf32>
    %20 = arith.addf %7, %11 : vector<2x128xf32>
    %21 = arith.addf %15, %19 : vector<2x128xf32>
    %22 = arith.addf %20, %21 : vector<2x128xf32>
    %23 = arith.maximumf %7, %11 : vector<2x128xf32>
    %24 = arith.maximumf %15, %19 : vector<2x128xf32>
    %25 = arith.maximumf %23, %24 : vector<2x128xf32>
    %c0_14 = arith.constant 0 : index
    %c0_15 = arith.constant 0 : index
    %26 = vector.load %arg5[%c0_14, %c0_15] : memref<2x128xf32, #tpu.memory_space<vmem>>, vector<2x128xf32>
    %27 = arith.addf %26, %22 : vector<2x128xf32>
    %c0_16 = arith.constant 0 : index
    %c0_17 = arith.constant 0 : index
    %28 = vector.load %arg5[%c0_16, %c0_17] : memref<2x128xf32, #tpu.memory_space<vmem>>, vector<2x128xf32>
    tpu.vector_store %arg5[%c0_16, %c0_17], %27 {strides = array<i32>} : memref<2x128xf32, #tpu.memory_space<vmem>>, vector<2x128xf32>,
    %c0_18 = arith.constant 0 : index
    %c0_19 = arith.constant 0 : index
    %29 = vector.load %arg6[%c0_18, %c0_19] : memref<2x128xf32, #tpu.memory_space<vmem>>, vector<2x128xf32>
    %30 = arith.maximumf %29, %25 : vector<2x128xf32>
    %c0_20 = arith.constant 0 : index
    %c0_21 = arith.constant 0 : index
    %31 = vector.load %arg6[%c0_20, %c0_21] : memref<2x128xf32, #tpu.memory_space<vmem>>, vector<2x128xf32>
    tpu.vector_store %arg6[%c0_20, %c0_21], %30 {strides = array<i32>} : memref<2x128xf32, #tpu.memory_space<vmem>>, vector<2x128xf32>,
    %c1_i32_22 = arith.constant 1 : i32
    %c0_i32_23 = arith.constant 0 : i32
    %32 = arith.cmpi eq, %arg2, %c0_i32_23 : i32
    %33 = arith.extui %32 : i1 to i32
    %c0_i32_24 = arith.constant 0 : i32
    %34 = arith.cmpi ne, %33, %c0_i32_24 : i32
    scf.if %34 {
      %c0_25 = arith.constant 0 : index
      %c0_26 = arith.constant 0 : index
      %35 = vector.load %arg5[%c0_25, %c0_26] : memref<2x128xf32, #tpu.memory_space<vmem>>, vector<2x128xf32>
      %cst = arith.constant 2.500000e-01 : f32
      %36 = vector.broadcast %cst : f32 to vector<2x128xf32>
      %37 = arith.mulf %35, %36 : vector<2x128xf32>
      %c0_27 = arith.constant 0 : index
      %c0_28 = arith.constant 0 : index
      %c0_29 = arith.constant 0 : index
      %c0_30 = arith.constant 0 : index
      %38 = vector.load %arg4[%c0_27, %c0_28, %c0_29, %c0_30] : memref<1x2x2x128xf32, #tpu.memory_space<vmem>>, vector<1x1x2x128xf32>
      %39 = vector.shape_cast %38 : vector<1x1x2x128xf32> to vector<2x128xf32>
      %40 = vector.shape_cast %37 : vector<2x128xf32> to vector<1x1x2x128xf32>
      tpu.vector_store %arg4[%c0_27, %c0_28, %c0_29, %c0_30], %40 {strides = array<i32>} : memref<1x2x2x128xf32, #tpu.memory_space<vmem>>, vector<1x1x2x128xf32>,
      %c0_31 = arith.constant 0 : index
      %c0_32 = arith.constant 0 : index
      %41 = vector.load %arg6[%c0_31, %c0_32] : memref<2x128xf32, #tpu.memory_space<vmem>>, vector<2x128xf32>
      %c0_33 = arith.constant 0 : index
      %c1 = arith.constant 1 : index
      %c0_34 = arith.constant 0 : index
      %c0_35 = arith.constant 0 : index
      %42 = vector.load %arg4[%c0_33, %c1, %c0_34, %c0_35] : memref<1x2x2x128xf32, #tpu.memory_space<vmem>>, vector<1x1x2x128xf32>
      %43 = vector.shape_cast %42 : vector<1x1x2x128xf32> to vector<2x128xf32>
      %44 = vector.shape_cast %41 : vector<2x128xf32> to vector<1x1x2x128xf32>
      tpu.vector_store %arg4[%c0_33, %c1, %c0_34, %c0_35], %44 {strides = array<i32>} : memref<1x2x2x128xf32, #tpu.memory_space<vmem>>, vector<1x1x2x128xf32>,
    } else {
    }
    return
  }
  func.func @transform_0(%arg0: i32, %arg1: i32, %arg2: i32) -> (i32, i32, i32, i32) {
    %c0_i32 = arith.constant 0 : i32
    %c0_i32_0 = arith.constant 0 : i32
    return %arg0, %arg2, %arg1, %c0_i32 : i32, i32, i32, i32
  }
  func.func @transform_1(%arg0: i32, %arg1: i32, %arg2: i32) -> (i32, i32, i32, i32) {
    %c0_i32 = arith.constant 0 : i32
    %c0_i32_0 = arith.constant 0 : i32
    %c0_i32_1 = arith.constant 0 : i32
    return %arg0, %c0_i32, %arg1, %c0_i32_0 : i32, i32, i32, i32
  }
}

module attributes {stable_mosaic.version = 11 : i64} {
  func.func @_conv7x7_kernel(%arg0: i32, %arg1: i32, %arg2: memref<98xf32, #tpu.memory_space<smem>>, %arg3: memref<1xf32, #tpu.memory_space<smem>>, %arg4: memref<1x1x44x128xf32, #tpu.memory_space<vmem>>, %arg5: memref<1x1x16x128xf32, #tpu.memory_space<vmem>>, %arg6: memref<6x16x256xf32, #tpu.memory_space<vmem>>) attributes {dimension_semantics = [#tpu.dimension_semantics<parallel>, #tpu.dimension_semantics<parallel>], iteration_bounds = array<i64: 2, 1>, scalar_prefetch = 0 : i64, scratch_operands = 1 : i64, tpu.core_type = #tpu.core_type<tc>, window_params = [{transform_indices = @transform_0, window_bounds = array<i64: 98>}, {transform_indices = @transform_1, window_bounds = array<i64: 1>}, {transform_indices = @transform_2, window_bounds = array<i64: 1, 1, 44, 128>}, {transform_indices = @transform_3, window_bounds = array<i64: 1, 1, 16, 128>}]} {
    %c0 = arith.constant 0 : index
    %c0_0 = arith.constant 0 : index
    %c0_1 = arith.constant 0 : index
    %c0_2 = arith.constant 0 : index
    %0 = vector.load %arg4[%c0, %c0_0, %c0_1, %c0_2] : memref<1x1x44x128xf32, #tpu.memory_space<vmem>>, vector<1x1x16x128xf32>
    %1 = vector.shape_cast %0 : vector<1x1x16x128xf32> to vector<16x128xf32>
    %c0_3 = arith.constant 0 : index
    %2 = memref.load %arg2[%c0_3] : memref<98xf32, #tpu.memory_space<smem>>
    %3 = vector.broadcast %2 : f32 to vector<16x128xf32>
    %4 = arith.mulf %3, %1 : vector<16x128xf32>
    %c1 = arith.constant 1 : index
    %5 = memref.load %arg2[%c1] : memref<98xf32, #tpu.memory_space<smem>>
    %6 = vector.broadcast %5 : f32 to vector<16x128xf32>
    %7 = arith.mulf %6, %1 : vector<16x128xf32>
    %c2 = arith.constant 2 : index
    %8 = memref.load %arg2[%c2] : memref<98xf32, #tpu.memory_space<smem>>
    %9 = vector.broadcast %8 : f32 to vector<16x128xf32>
    %10 = arith.mulf %9, %1 : vector<16x128xf32>
    %c3 = arith.constant 3 : index
    %11 = memref.load %arg2[%c3] : memref<98xf32, #tpu.memory_space<smem>>
    %12 = vector.broadcast %11 : f32 to vector<16x128xf32>
    %13 = arith.mulf %12, %1 : vector<16x128xf32>
    %c4 = arith.constant 4 : index
    %14 = memref.load %arg2[%c4] : memref<98xf32, #tpu.memory_space<smem>>
    %15 = vector.broadcast %14 : f32 to vector<16x128xf32>
    %16 = arith.mulf %15, %1 : vector<16x128xf32>
    %c5 = arith.constant 5 : index
    %17 = memref.load %arg2[%c5] : memref<98xf32, #tpu.memory_space<smem>>
    %18 = vector.broadcast %17 : f32 to vector<16x128xf32>
    %19 = arith.mulf %18, %1 : vector<16x128xf32>
    %c6 = arith.constant 6 : index
    %20 = memref.load %arg2[%c6] : memref<98xf32, #tpu.memory_space<smem>>
    %21 = vector.broadcast %20 : f32 to vector<16x128xf32>
    %22 = arith.mulf %21, %1 : vector<16x128xf32>
    %c0_4 = arith.constant 0 : index
    %c0_5 = arith.constant 0 : index
    %c1_6 = arith.constant 1 : index
    %c0_7 = arith.constant 0 : index
    %23 = vector.load %arg4[%c0_4, %c0_5, %c1_6, %c0_7] : memref<1x1x44x128xf32, #tpu.memory_space<vmem>>, vector<1x1x16x128xf32>
    %24 = vector.shape_cast %23 : vector<1x1x16x128xf32> to vector<16x128xf32>
    %c7 = arith.constant 7 : index
    %25 = memref.load %arg2[%c7] : memref<98xf32, #tpu.memory_space<smem>>
    %26 = vector.broadcast %25 : f32 to vector<16x128xf32>
    %27 = arith.mulf %26, %24 : vector<16x128xf32>
    %28 = arith.addf %4, %27 : vector<16x128xf32>
    %c8 = arith.constant 8 : index
    %29 = memref.load %arg2[%c8] : memref<98xf32, #tpu.memory_space<smem>>
    %30 = vector.broadcast %29 : f32 to vector<16x128xf32>
    %31 = arith.mulf %30, %24 : vector<16x128xf32>
    %32 = arith.addf %7, %31 : vector<16x128xf32>
    %c9 = arith.constant 9 : index
    %33 = memref.load %arg2[%c9] : memref<98xf32, #tpu.memory_space<smem>>
    %34 = vector.broadcast %33 : f32 to vector<16x128xf32>
    %35 = arith.mulf %34, %24 : vector<16x128xf32>
    %36 = arith.addf %10, %35 : vector<16x128xf32>
    %c10 = arith.constant 10 : index
    %37 = memref.load %arg2[%c10] : memref<98xf32, #tpu.memory_space<smem>>
    %38 = vector.broadcast %37 : f32 to vector<16x128xf32>
    %39 = arith.mulf %38, %24 : vector<16x128xf32>
    %40 = arith.addf %13, %39 : vector<16x128xf32>
    %c11 = arith.constant 11 : index
    %41 = memref.load %arg2[%c11] : memref<98xf32, #tpu.memory_space<smem>>
    %42 = vector.broadcast %41 : f32 to vector<16x128xf32>
    %43 = arith.mulf %42, %24 : vector<16x128xf32>
    %44 = arith.addf %16, %43 : vector<16x128xf32>
    %c12 = arith.constant 12 : index
    %45 = memref.load %arg2[%c12] : memref<98xf32, #tpu.memory_space<smem>>
    %46 = vector.broadcast %45 : f32 to vector<16x128xf32>
    %47 = arith.mulf %46, %24 : vector<16x128xf32>
    %48 = arith.addf %19, %47 : vector<16x128xf32>
    %c13 = arith.constant 13 : index
    %49 = memref.load %arg2[%c13] : memref<98xf32, #tpu.memory_space<smem>>
    %50 = vector.broadcast %49 : f32 to vector<16x128xf32>
    %51 = arith.mulf %50, %24 : vector<16x128xf32>
    %52 = arith.addf %22, %51 : vector<16x128xf32>
    %c0_8 = arith.constant 0 : index
    %c0_9 = arith.constant 0 : index
    %c2_10 = arith.constant 2 : index
    %c0_11 = arith.constant 0 : index
    %53 = vector.load %arg4[%c0_8, %c0_9, %c2_10, %c0_11] : memref<1x1x44x128xf32, #tpu.memory_space<vmem>>, vector<1x1x16x128xf32>
    %54 = vector.shape_cast %53 : vector<1x1x16x128xf32> to vector<16x128xf32>
    %c14 = arith.constant 14 : index
    %55 = memref.load %arg2[%c14] : memref<98xf32, #tpu.memory_space<smem>>
    %56 = vector.broadcast %55 : f32 to vector<16x128xf32>
    %57 = arith.mulf %56, %54 : vector<16x128xf32>
    %58 = arith.addf %28, %57 : vector<16x128xf32>
    %c15 = arith.constant 15 : index
    %59 = memref.load %arg2[%c15] : memref<98xf32, #tpu.memory_space<smem>>
    %60 = vector.broadcast %59 : f32 to vector<16x128xf32>
    %61 = arith.mulf %60, %54 : vector<16x128xf32>
    %62 = arith.addf %32, %61 : vector<16x128xf32>
    %c16 = arith.constant 16 : index
    %63 = memref.load %arg2[%c16] : memref<98xf32, #tpu.memory_space<smem>>
    %64 = vector.broadcast %63 : f32 to vector<16x128xf32>
    %65 = arith.mulf %64, %54 : vector<16x128xf32>
    %66 = arith.addf %36, %65 : vector<16x128xf32>
    %c17 = arith.constant 17 : index
    %67 = memref.load %arg2[%c17] : memref<98xf32, #tpu.memory_space<smem>>
    %68 = vector.broadcast %67 : f32 to vector<16x128xf32>
    %69 = arith.mulf %68, %54 : vector<16x128xf32>
    %70 = arith.addf %40, %69 : vector<16x128xf32>
    %c18 = arith.constant 18 : index
    %71 = memref.load %arg2[%c18] : memref<98xf32, #tpu.memory_space<smem>>
    %72 = vector.broadcast %71 : f32 to vector<16x128xf32>
    %73 = arith.mulf %72, %54 : vector<16x128xf32>
    %74 = arith.addf %44, %73 : vector<16x128xf32>
    %c19 = arith.constant 19 : index
    %75 = memref.load %arg2[%c19] : memref<98xf32, #tpu.memory_space<smem>>
    %76 = vector.broadcast %75 : f32 to vector<16x128xf32>
    %77 = arith.mulf %76, %54 : vector<16x128xf32>
    %78 = arith.addf %48, %77 : vector<16x128xf32>
    %c20 = arith.constant 20 : index
    %79 = memref.load %arg2[%c20] : memref<98xf32, #tpu.memory_space<smem>>
    %80 = vector.broadcast %79 : f32 to vector<16x128xf32>
    %81 = arith.mulf %80, %54 : vector<16x128xf32>
    %82 = arith.addf %52, %81 : vector<16x128xf32>
    %c0_12 = arith.constant 0 : index
    %c0_13 = arith.constant 0 : index
    %c3_14 = arith.constant 3 : index
    %c0_15 = arith.constant 0 : index
    %83 = vector.load %arg4[%c0_12, %c0_13, %c3_14, %c0_15] : memref<1x1x44x128xf32, #tpu.memory_space<vmem>>, vector<1x1x16x128xf32>
    %84 = vector.shape_cast %83 : vector<1x1x16x128xf32> to vector<16x128xf32>
    %c21 = arith.constant 21 : index
    %85 = memref.load %arg2[%c21] : memref<98xf32, #tpu.memory_space<smem>>
    %86 = vector.broadcast %85 : f32 to vector<16x128xf32>
    %87 = arith.mulf %86, %84 : vector<16x128xf32>
    %88 = arith.addf %58, %87 : vector<16x128xf32>
    %c22 = arith.constant 22 : index
    %89 = memref.load %arg2[%c22] : memref<98xf32, #tpu.memory_space<smem>>
    %90 = vector.broadcast %89 : f32 to vector<16x128xf32>
    %91 = arith.mulf %90, %84 : vector<16x128xf32>
    %92 = arith.addf %62, %91 : vector<16x128xf32>
    %c23 = arith.constant 23 : index
    %93 = memref.load %arg2[%c23] : memref<98xf32, #tpu.memory_space<smem>>
    %94 = vector.broadcast %93 : f32 to vector<16x128xf32>
    %95 = arith.mulf %94, %84 : vector<16x128xf32>
    %96 = arith.addf %66, %95 : vector<16x128xf32>
    %c24 = arith.constant 24 : index
    %97 = memref.load %arg2[%c24] : memref<98xf32, #tpu.memory_space<smem>>
    %98 = vector.broadcast %97 : f32 to vector<16x128xf32>
    %99 = arith.mulf %98, %84 : vector<16x128xf32>
    %100 = arith.addf %70, %99 : vector<16x128xf32>
    %c25 = arith.constant 25 : index
    %101 = memref.load %arg2[%c25] : memref<98xf32, #tpu.memory_space<smem>>
    %102 = vector.broadcast %101 : f32 to vector<16x128xf32>
    %103 = arith.mulf %102, %84 : vector<16x128xf32>
    %104 = arith.addf %74, %103 : vector<16x128xf32>
    %c26 = arith.constant 26 : index
    %105 = memref.load %arg2[%c26] : memref<98xf32, #tpu.memory_space<smem>>
    %106 = vector.broadcast %105 : f32 to vector<16x128xf32>
    %107 = arith.mulf %106, %84 : vector<16x128xf32>
    %108 = arith.addf %78, %107 : vector<16x128xf32>
    %c27 = arith.constant 27 : index
    %109 = memref.load %arg2[%c27] : memref<98xf32, #tpu.memory_space<smem>>
    %110 = vector.broadcast %109 : f32 to vector<16x128xf32>
    %111 = arith.mulf %110, %84 : vector<16x128xf32>
    %112 = arith.addf %82, %111 : vector<16x128xf32>
    %c0_16 = arith.constant 0 : index
    %c0_17 = arith.constant 0 : index
    %c4_18 = arith.constant 4 : index
    %c0_19 = arith.constant 0 : index
    %113 = vector.load %arg4[%c0_16, %c0_17, %c4_18, %c0_19] : memref<1x1x44x128xf32, #tpu.memory_space<vmem>>, vector<1x1x16x128xf32>
    %114 = vector.shape_cast %113 : vector<1x1x16x128xf32> to vector<16x128xf32>
    %c28 = arith.constant 28 : index
    %115 = memref.load %arg2[%c28] : memref<98xf32, #tpu.memory_space<smem>>
    %116 = vector.broadcast %115 : f32 to vector<16x128xf32>
    %117 = arith.mulf %116, %114 : vector<16x128xf32>
    %118 = arith.addf %88, %117 : vector<16x128xf32>
    %c29 = arith.constant 29 : index
    %119 = memref.load %arg2[%c29] : memref<98xf32, #tpu.memory_space<smem>>
    %120 = vector.broadcast %119 : f32 to vector<16x128xf32>
    %121 = arith.mulf %120, %114 : vector<16x128xf32>
    %122 = arith.addf %92, %121 : vector<16x128xf32>
    %c30 = arith.constant 30 : index
    %123 = memref.load %arg2[%c30] : memref<98xf32, #tpu.memory_space<smem>>
    %124 = vector.broadcast %123 : f32 to vector<16x128xf32>
    %125 = arith.mulf %124, %114 : vector<16x128xf32>
    %126 = arith.addf %96, %125 : vector<16x128xf32>
    %c31 = arith.constant 31 : index
    %127 = memref.load %arg2[%c31] : memref<98xf32, #tpu.memory_space<smem>>
    %128 = vector.broadcast %127 : f32 to vector<16x128xf32>
    %129 = arith.mulf %128, %114 : vector<16x128xf32>
    %130 = arith.addf %100, %129 : vector<16x128xf32>
    %c32 = arith.constant 32 : index
    %131 = memref.load %arg2[%c32] : memref<98xf32, #tpu.memory_space<smem>>
    %132 = vector.broadcast %131 : f32 to vector<16x128xf32>
    %133 = arith.mulf %132, %114 : vector<16x128xf32>
    %134 = arith.addf %104, %133 : vector<16x128xf32>
    %c33 = arith.constant 33 : index
    %135 = memref.load %arg2[%c33] : memref<98xf32, #tpu.memory_space<smem>>
    %136 = vector.broadcast %135 : f32 to vector<16x128xf32>
    %137 = arith.mulf %136, %114 : vector<16x128xf32>
    %138 = arith.addf %108, %137 : vector<16x128xf32>
    %c34 = arith.constant 34 : index
    %139 = memref.load %arg2[%c34] : memref<98xf32, #tpu.memory_space<smem>>
    %140 = vector.broadcast %139 : f32 to vector<16x128xf32>
    %141 = arith.mulf %140, %114 : vector<16x128xf32>
    %142 = arith.addf %112, %141 : vector<16x128xf32>
    %c0_20 = arith.constant 0 : index
    %c0_21 = arith.constant 0 : index
    %c5_22 = arith.constant 5 : index
    %c0_23 = arith.constant 0 : index
    %143 = vector.load %arg4[%c0_20, %c0_21, %c5_22, %c0_23] : memref<1x1x44x128xf32, #tpu.memory_space<vmem>>, vector<1x1x16x128xf32>
    %144 = vector.shape_cast %143 : vector<1x1x16x128xf32> to vector<16x128xf32>
    %c35 = arith.constant 35 : index
    %145 = memref.load %arg2[%c35] : memref<98xf32, #tpu.memory_space<smem>>
    %146 = vector.broadcast %145 : f32 to vector<16x128xf32>
    %147 = arith.mulf %146, %144 : vector<16x128xf32>
    %148 = arith.addf %118, %147 : vector<16x128xf32>
    %c36 = arith.constant 36 : index
    %149 = memref.load %arg2[%c36] : memref<98xf32, #tpu.memory_space<smem>>
    %150 = vector.broadcast %149 : f32 to vector<16x128xf32>
    %151 = arith.mulf %150, %144 : vector<16x128xf32>
    %152 = arith.addf %122, %151 : vector<16x128xf32>
    %c37 = arith.constant 37 : index
    %153 = memref.load %arg2[%c37] : memref<98xf32, #tpu.memory_space<smem>>
    %154 = vector.broadcast %153 : f32 to vector<16x128xf32>
    %155 = arith.mulf %154, %144 : vector<16x128xf32>
    %156 = arith.addf %126, %155 : vector<16x128xf32>
    %c38 = arith.constant 38 : index
    %157 = memref.load %arg2[%c38] : memref<98xf32, #tpu.memory_space<smem>>
    %158 = vector.broadcast %157 : f32 to vector<16x128xf32>
    %159 = arith.mulf %158, %144 : vector<16x128xf32>
    %160 = arith.addf %130, %159 : vector<16x128xf32>
    %c39 = arith.constant 39 : index
    %161 = memref.load %arg2[%c39] : memref<98xf32, #tpu.memory_space<smem>>
    %162 = vector.broadcast %161 : f32 to vector<16x128xf32>
    %163 = arith.mulf %162, %144 : vector<16x128xf32>
    %164 = arith.addf %134, %163 : vector<16x128xf32>
    %c40 = arith.constant 40 : index
    %165 = memref.load %arg2[%c40] : memref<98xf32, #tpu.memory_space<smem>>
    %166 = vector.broadcast %165 : f32 to vector<16x128xf32>
    %167 = arith.mulf %166, %144 : vector<16x128xf32>
    %168 = arith.addf %138, %167 : vector<16x128xf32>
    %c41 = arith.constant 41 : index
    %169 = memref.load %arg2[%c41] : memref<98xf32, #tpu.memory_space<smem>>
    %170 = vector.broadcast %169 : f32 to vector<16x128xf32>
    %171 = arith.mulf %170, %144 : vector<16x128xf32>
    %172 = arith.addf %142, %171 : vector<16x128xf32>
    %c0_24 = arith.constant 0 : index
    %c0_25 = arith.constant 0 : index
    %c6_26 = arith.constant 6 : index
    %c0_27 = arith.constant 0 : index
    %173 = vector.load %arg4[%c0_24, %c0_25, %c6_26, %c0_27] : memref<1x1x44x128xf32, #tpu.memory_space<vmem>>, vector<1x1x16x128xf32>
    %174 = vector.shape_cast %173 : vector<1x1x16x128xf32> to vector<16x128xf32>
    %c42 = arith.constant 42 : index
    %175 = memref.load %arg2[%c42] : memref<98xf32, #tpu.memory_space<smem>>
    %176 = vector.broadcast %175 : f32 to vector<16x128xf32>
    %177 = arith.mulf %176, %174 : vector<16x128xf32>
    %178 = arith.addf %148, %177 : vector<16x128xf32>
    %c43 = arith.constant 43 : index
    %179 = memref.load %arg2[%c43] : memref<98xf32, #tpu.memory_space<smem>>
    %180 = vector.broadcast %179 : f32 to vector<16x128xf32>
    %181 = arith.mulf %180, %174 : vector<16x128xf32>
    %182 = arith.addf %152, %181 : vector<16x128xf32>
    %c44 = arith.constant 44 : index
    %183 = memref.load %arg2[%c44] : memref<98xf32, #tpu.memory_space<smem>>
    %184 = vector.broadcast %183 : f32 to vector<16x128xf32>
    %185 = arith.mulf %184, %174 : vector<16x128xf32>
    %186 = arith.addf %156, %185 : vector<16x128xf32>
    %c45 = arith.constant 45 : index
    %187 = memref.load %arg2[%c45] : memref<98xf32, #tpu.memory_space<smem>>
    %188 = vector.broadcast %187 : f32 to vector<16x128xf32>
    %189 = arith.mulf %188, %174 : vector<16x128xf32>
    %190 = arith.addf %160, %189 : vector<16x128xf32>
    %c46 = arith.constant 46 : index
    %191 = memref.load %arg2[%c46] : memref<98xf32, #tpu.memory_space<smem>>
    %192 = vector.broadcast %191 : f32 to vector<16x128xf32>
    %193 = arith.mulf %192, %174 : vector<16x128xf32>
    %194 = arith.addf %164, %193 : vector<16x128xf32>
    %c47 = arith.constant 47 : index
    %195 = memref.load %arg2[%c47] : memref<98xf32, #tpu.memory_space<smem>>
    %196 = vector.broadcast %195 : f32 to vector<16x128xf32>
    %197 = arith.mulf %196, %174 : vector<16x128xf32>
    %198 = arith.addf %168, %197 : vector<16x128xf32>
    %c48 = arith.constant 48 : index
    %199 = memref.load %arg2[%c48] : memref<98xf32, #tpu.memory_space<smem>>
    %200 = vector.broadcast %199 : f32 to vector<16x128xf32>
    %201 = arith.mulf %200, %174 : vector<16x128xf32>
    %202 = arith.addf %172, %201 : vector<16x128xf32>
    %c0_28 = arith.constant 0 : index
    %c0_29 = arith.constant 0 : index
    %c22_30 = arith.constant 22 : index
    %c0_31 = arith.constant 0 : index
    %203 = vector.load %arg4[%c0_28, %c0_29, %c22_30, %c0_31] : memref<1x1x44x128xf32, #tpu.memory_space<vmem>>, vector<1x1x16x128xf32>
    %204 = vector.shape_cast %203 : vector<1x1x16x128xf32> to vector<16x128xf32>
    %c49 = arith.constant 49 : index
    %205 = memref.load %arg2[%c49] : memref<98xf32, #tpu.memory_space<smem>>
    %206 = vector.broadcast %205 : f32 to vector<16x128xf32>
    %207 = arith.mulf %206, %204 : vector<16x128xf32>
    %208 = arith.addf %178, %207 : vector<16x128xf32>
    %c50 = arith.constant 50 : index
    %209 = memref.load %arg2[%c50] : memref<98xf32, #tpu.memory_space<smem>>
    %210 = vector.broadcast %209 : f32 to vector<16x128xf32>
    %211 = arith.mulf %210, %204 : vector<16x128xf32>
    %212 = arith.addf %182, %211 : vector<16x128xf32>
    %c51 = arith.constant 51 : index
    %213 = memref.load %arg2[%c51] : memref<98xf32, #tpu.memory_space<smem>>
    %214 = vector.broadcast %213 : f32 to vector<16x128xf32>
    %215 = arith.mulf %214, %204 : vector<16x128xf32>
    %216 = arith.addf %186, %215 : vector<16x128xf32>
    %c52 = arith.constant 52 : index
    %217 = memref.load %arg2[%c52] : memref<98xf32, #tpu.memory_space<smem>>
    %218 = vector.broadcast %217 : f32 to vector<16x128xf32>
    %219 = arith.mulf %218, %204 : vector<16x128xf32>
    %220 = arith.addf %190, %219 : vector<16x128xf32>
    %c53 = arith.constant 53 : index
    %221 = memref.load %arg2[%c53] : memref<98xf32, #tpu.memory_space<smem>>
    %222 = vector.broadcast %221 : f32 to vector<16x128xf32>
    %223 = arith.mulf %222, %204 : vector<16x128xf32>
    %224 = arith.addf %194, %223 : vector<16x128xf32>
    %c54 = arith.constant 54 : index
    %225 = memref.load %arg2[%c54] : memref<98xf32, #tpu.memory_space<smem>>
    %226 = vector.broadcast %225 : f32 to vector<16x128xf32>
    %227 = arith.mulf %226, %204 : vector<16x128xf32>
    %228 = arith.addf %198, %227 : vector<16x128xf32>
    %c55 = arith.constant 55 : index
    %229 = memref.load %arg2[%c55] : memref<98xf32, #tpu.memory_space<smem>>
    %230 = vector.broadcast %229 : f32 to vector<16x128xf32>
    %231 = arith.mulf %230, %204 : vector<16x128xf32>
    %232 = arith.addf %202, %231 : vector<16x128xf32>
    %c0_32 = arith.constant 0 : index
    %c0_33 = arith.constant 0 : index
    %c23_34 = arith.constant 23 : index
    %c0_35 = arith.constant 0 : index
    %233 = vector.load %arg4[%c0_32, %c0_33, %c23_34, %c0_35] : memref<1x1x44x128xf32, #tpu.memory_space<vmem>>, vector<1x1x16x128xf32>
    %234 = vector.shape_cast %233 : vector<1x1x16x128xf32> to vector<16x128xf32>
    %c56 = arith.constant 56 : index
    %235 = memref.load %arg2[%c56] : memref<98xf32, #tpu.memory_space<smem>>
    %236 = vector.broadcast %235 : f32 to vector<16x128xf32>
    %237 = arith.mulf %236, %234 : vector<16x128xf32>
    %238 = arith.addf %208, %237 : vector<16x128xf32>
    %c57 = arith.constant 57 : index
    %239 = memref.load %arg2[%c57] : memref<98xf32, #tpu.memory_space<smem>>
    %240 = vector.broadcast %239 : f32 to vector<16x128xf32>
    %241 = arith.mulf %240, %234 : vector<16x128xf32>
    %242 = arith.addf %212, %241 : vector<16x128xf32>
    %c58 = arith.constant 58 : index
    %243 = memref.load %arg2[%c58] : memref<98xf32, #tpu.memory_space<smem>>
    %244 = vector.broadcast %243 : f32 to vector<16x128xf32>
    %245 = arith.mulf %244, %234 : vector<16x128xf32>
    %246 = arith.addf %216, %245 : vector<16x128xf32>
    %c59 = arith.constant 59 : index
    %247 = memref.load %arg2[%c59] : memref<98xf32, #tpu.memory_space<smem>>
    %248 = vector.broadcast %247 : f32 to vector<16x128xf32>
    %249 = arith.mulf %248, %234 : vector<16x128xf32>
    %250 = arith.addf %220, %249 : vector<16x128xf32>
    %c60 = arith.constant 60 : index
    %251 = memref.load %arg2[%c60] : memref<98xf32, #tpu.memory_space<smem>>
    %252 = vector.broadcast %251 : f32 to vector<16x128xf32>
    %253 = arith.mulf %252, %234 : vector<16x128xf32>
    %254 = arith.addf %224, %253 : vector<16x128xf32>
    %c61 = arith.constant 61 : index
    %255 = memref.load %arg2[%c61] : memref<98xf32, #tpu.memory_space<smem>>
    %256 = vector.broadcast %255 : f32 to vector<16x128xf32>
    %257 = arith.mulf %256, %234 : vector<16x128xf32>
    %258 = arith.addf %228, %257 : vector<16x128xf32>
    %c62 = arith.constant 62 : index
    %259 = memref.load %arg2[%c62] : memref<98xf32, #tpu.memory_space<smem>>
    %260 = vector.broadcast %259 : f32 to vector<16x128xf32>
    %261 = arith.mulf %260, %234 : vector<16x128xf32>
    %262 = arith.addf %232, %261 : vector<16x128xf32>
    %c0_36 = arith.constant 0 : index
    %c0_37 = arith.constant 0 : index
    %c24_38 = arith.constant 24 : index
    %c0_39 = arith.constant 0 : index
    %263 = vector.load %arg4[%c0_36, %c0_37, %c24_38, %c0_39] : memref<1x1x44x128xf32, #tpu.memory_space<vmem>>, vector<1x1x16x128xf32>
    %264 = vector.shape_cast %263 : vector<1x1x16x128xf32> to vector<16x128xf32>
    %c63 = arith.constant 63 : index
    %265 = memref.load %arg2[%c63] : memref<98xf32, #tpu.memory_space<smem>>
    %266 = vector.broadcast %265 : f32 to vector<16x128xf32>
    %267 = arith.mulf %266, %264 : vector<16x128xf32>
    %268 = arith.addf %238, %267 : vector<16x128xf32>
    %c64 = arith.constant 64 : index
    %269 = memref.load %arg2[%c64] : memref<98xf32, #tpu.memory_space<smem>>
    %270 = vector.broadcast %269 : f32 to vector<16x128xf32>
    %271 = arith.mulf %270, %264 : vector<16x128xf32>
    %272 = arith.addf %242, %271 : vector<16x128xf32>
    %c65 = arith.constant 65 : index
    %273 = memref.load %arg2[%c65] : memref<98xf32, #tpu.memory_space<smem>>
    %274 = vector.broadcast %273 : f32 to vector<16x128xf32>
    %275 = arith.mulf %274, %264 : vector<16x128xf32>
    %276 = arith.addf %246, %275 : vector<16x128xf32>
    %c66 = arith.constant 66 : index
    %277 = memref.load %arg2[%c66] : memref<98xf32, #tpu.memory_space<smem>>
    %278 = vector.broadcast %277 : f32 to vector<16x128xf32>
    %279 = arith.mulf %278, %264 : vector<16x128xf32>
    %280 = arith.addf %250, %279 : vector<16x128xf32>
    %c67 = arith.constant 67 : index
    %281 = memref.load %arg2[%c67] : memref<98xf32, #tpu.memory_space<smem>>
    %282 = vector.broadcast %281 : f32 to vector<16x128xf32>
    %283 = arith.mulf %282, %264 : vector<16x128xf32>
    %284 = arith.addf %254, %283 : vector<16x128xf32>
    %c68 = arith.constant 68 : index
    %285 = memref.load %arg2[%c68] : memref<98xf32, #tpu.memory_space<smem>>
    %286 = vector.broadcast %285 : f32 to vector<16x128xf32>
    %287 = arith.mulf %286, %264 : vector<16x128xf32>
    %288 = arith.addf %258, %287 : vector<16x128xf32>
    %c69 = arith.constant 69 : index
    %289 = memref.load %arg2[%c69] : memref<98xf32, #tpu.memory_space<smem>>
    %290 = vector.broadcast %289 : f32 to vector<16x128xf32>
    %291 = arith.mulf %290, %264 : vector<16x128xf32>
    %292 = arith.addf %262, %291 : vector<16x128xf32>
    %c0_40 = arith.constant 0 : index
    %c0_41 = arith.constant 0 : index
    %c25_42 = arith.constant 25 : index
    %c0_43 = arith.constant 0 : index
    %293 = vector.load %arg4[%c0_40, %c0_41, %c25_42, %c0_43] : memref<1x1x44x128xf32, #tpu.memory_space<vmem>>, vector<1x1x16x128xf32>
    %294 = vector.shape_cast %293 : vector<1x1x16x128xf32> to vector<16x128xf32>
    %c70 = arith.constant 70 : index
    %295 = memref.load %arg2[%c70] : memref<98xf32, #tpu.memory_space<smem>>
    %296 = vector.broadcast %295 : f32 to vector<16x128xf32>
    %297 = arith.mulf %296, %294 : vector<16x128xf32>
    %298 = arith.addf %268, %297 : vector<16x128xf32>
    %c71 = arith.constant 71 : index
    %299 = memref.load %arg2[%c71] : memref<98xf32, #tpu.memory_space<smem>>
    %300 = vector.broadcast %299 : f32 to vector<16x128xf32>
    %301 = arith.mulf %300, %294 : vector<16x128xf32>
    %302 = arith.addf %272, %301 : vector<16x128xf32>
    %c72 = arith.constant 72 : index
    %303 = memref.load %arg2[%c72] : memref<98xf32, #tpu.memory_space<smem>>
    %304 = vector.broadcast %303 : f32 to vector<16x128xf32>
    %305 = arith.mulf %304, %294 : vector<16x128xf32>
    %306 = arith.addf %276, %305 : vector<16x128xf32>
    %c73 = arith.constant 73 : index
    %307 = memref.load %arg2[%c73] : memref<98xf32, #tpu.memory_space<smem>>
    %308 = vector.broadcast %307 : f32 to vector<16x128xf32>
    %309 = arith.mulf %308, %294 : vector<16x128xf32>
    %310 = arith.addf %280, %309 : vector<16x128xf32>
    %c74 = arith.constant 74 : index
    %311 = memref.load %arg2[%c74] : memref<98xf32, #tpu.memory_space<smem>>
    %312 = vector.broadcast %311 : f32 to vector<16x128xf32>
    %313 = arith.mulf %312, %294 : vector<16x128xf32>
    %314 = arith.addf %284, %313 : vector<16x128xf32>
    %c75 = arith.constant 75 : index
    %315 = memref.load %arg2[%c75] : memref<98xf32, #tpu.memory_space<smem>>
    %316 = vector.broadcast %315 : f32 to vector<16x128xf32>
    %317 = arith.mulf %316, %294 : vector<16x128xf32>
    %318 = arith.addf %288, %317 : vector<16x128xf32>
    %c76 = arith.constant 76 : index
    %319 = memref.load %arg2[%c76] : memref<98xf32, #tpu.memory_space<smem>>
    %320 = vector.broadcast %319 : f32 to vector<16x128xf32>
    %321 = arith.mulf %320, %294 : vector<16x128xf32>
    %322 = arith.addf %292, %321 : vector<16x128xf32>
    %c0_44 = arith.constant 0 : index
    %c0_45 = arith.constant 0 : index
    %c26_46 = arith.constant 26 : index
    %c0_47 = arith.constant 0 : index
    %323 = vector.load %arg4[%c0_44, %c0_45, %c26_46, %c0_47] : memref<1x1x44x128xf32, #tpu.memory_space<vmem>>, vector<1x1x16x128xf32>
    %324 = vector.shape_cast %323 : vector<1x1x16x128xf32> to vector<16x128xf32>
    %c77 = arith.constant 77 : index
    %325 = memref.load %arg2[%c77] : memref<98xf32, #tpu.memory_space<smem>>
    %326 = vector.broadcast %325 : f32 to vector<16x128xf32>
    %327 = arith.mulf %326, %324 : vector<16x128xf32>
    %328 = arith.addf %298, %327 : vector<16x128xf32>
    %c78 = arith.constant 78 : index
    %329 = memref.load %arg2[%c78] : memref<98xf32, #tpu.memory_space<smem>>
    %330 = vector.broadcast %329 : f32 to vector<16x128xf32>
    %331 = arith.mulf %330, %324 : vector<16x128xf32>
    %332 = arith.addf %302, %331 : vector<16x128xf32>
    %c79 = arith.constant 79 : index
    %333 = memref.load %arg2[%c79] : memref<98xf32, #tpu.memory_space<smem>>
    %334 = vector.broadcast %333 : f32 to vector<16x128xf32>
    %335 = arith.mulf %334, %324 : vector<16x128xf32>
    %336 = arith.addf %306, %335 : vector<16x128xf32>
    %c80 = arith.constant 80 : index
    %337 = memref.load %arg2[%c80] : memref<98xf32, #tpu.memory_space<smem>>
    %338 = vector.broadcast %337 : f32 to vector<16x128xf32>
    %339 = arith.mulf %338, %324 : vector<16x128xf32>
    %340 = arith.addf %310, %339 : vector<16x128xf32>
    %c81 = arith.constant 81 : index
    %341 = memref.load %arg2[%c81] : memref<98xf32, #tpu.memory_space<smem>>
    %342 = vector.broadcast %341 : f32 to vector<16x128xf32>
    %343 = arith.mulf %342, %324 : vector<16x128xf32>
    %344 = arith.addf %314, %343 : vector<16x128xf32>
    %c82 = arith.constant 82 : index
    %345 = memref.load %arg2[%c82] : memref<98xf32, #tpu.memory_space<smem>>
    %346 = vector.broadcast %345 : f32 to vector<16x128xf32>
    %347 = arith.mulf %346, %324 : vector<16x128xf32>
    %348 = arith.addf %318, %347 : vector<16x128xf32>
    %c83 = arith.constant 83 : index
    %349 = memref.load %arg2[%c83] : memref<98xf32, #tpu.memory_space<smem>>
    %350 = vector.broadcast %349 : f32 to vector<16x128xf32>
    %351 = arith.mulf %350, %324 : vector<16x128xf32>
    %352 = arith.addf %322, %351 : vector<16x128xf32>
    %c0_48 = arith.constant 0 : index
    %c0_49 = arith.constant 0 : index
    %c27_50 = arith.constant 27 : index
    %c0_51 = arith.constant 0 : index
    %353 = vector.load %arg4[%c0_48, %c0_49, %c27_50, %c0_51] : memref<1x1x44x128xf32, #tpu.memory_space<vmem>>, vector<1x1x16x128xf32>
    %354 = vector.shape_cast %353 : vector<1x1x16x128xf32> to vector<16x128xf32>
    %c84 = arith.constant 84 : index
    %355 = memref.load %arg2[%c84] : memref<98xf32, #tpu.memory_space<smem>>
    %356 = vector.broadcast %355 : f32 to vector<16x128xf32>
    %357 = arith.mulf %356, %354 : vector<16x128xf32>
    %358 = arith.addf %328, %357 : vector<16x128xf32>
    %c85 = arith.constant 85 : index
    %359 = memref.load %arg2[%c85] : memref<98xf32, #tpu.memory_space<smem>>
    %360 = vector.broadcast %359 : f32 to vector<16x128xf32>
    %361 = arith.mulf %360, %354 : vector<16x128xf32>
    %362 = arith.addf %332, %361 : vector<16x128xf32>
    %c86 = arith.constant 86 : index
    %363 = memref.load %arg2[%c86] : memref<98xf32, #tpu.memory_space<smem>>
    %364 = vector.broadcast %363 : f32 to vector<16x128xf32>
    %365 = arith.mulf %364, %354 : vector<16x128xf32>
    %366 = arith.addf %336, %365 : vector<16x128xf32>
    %c87 = arith.constant 87 : index
    %367 = memref.load %arg2[%c87] : memref<98xf32, #tpu.memory_space<smem>>
    %368 = vector.broadcast %367 : f32 to vector<16x128xf32>
    %369 = arith.mulf %368, %354 : vector<16x128xf32>
    %370 = arith.addf %340, %369 : vector<16x128xf32>
    %c88 = arith.constant 88 : index
    %371 = memref.load %arg2[%c88] : memref<98xf32, #tpu.memory_space<smem>>
    %372 = vector.broadcast %371 : f32 to vector<16x128xf32>
    %373 = arith.mulf %372, %354 : vector<16x128xf32>
    %374 = arith.addf %344, %373 : vector<16x128xf32>
    %c89 = arith.constant 89 : index
    %375 = memref.load %arg2[%c89] : memref<98xf32, #tpu.memory_space<smem>>
    %376 = vector.broadcast %375 : f32 to vector<16x128xf32>
    %377 = arith.mulf %376, %354 : vector<16x128xf32>
    %378 = arith.addf %348, %377 : vector<16x128xf32>
    %c90 = arith.constant 90 : index
    %379 = memref.load %arg2[%c90] : memref<98xf32, #tpu.memory_space<smem>>
    %380 = vector.broadcast %379 : f32 to vector<16x128xf32>
    %381 = arith.mulf %380, %354 : vector<16x128xf32>
    %382 = arith.addf %352, %381 : vector<16x128xf32>
    %c0_52 = arith.constant 0 : index
    %c0_53 = arith.constant 0 : index
    %c28_54 = arith.constant 28 : index
    %c0_55 = arith.constant 0 : index
    %383 = vector.load %arg4[%c0_52, %c0_53, %c28_54, %c0_55] : memref<1x1x44x128xf32, #tpu.memory_space<vmem>>, vector<1x1x16x128xf32>
    %384 = vector.shape_cast %383 : vector<1x1x16x128xf32> to vector<16x128xf32>
    %c91 = arith.constant 91 : index
    %385 = memref.load %arg2[%c91] : memref<98xf32, #tpu.memory_space<smem>>
    %386 = vector.broadcast %385 : f32 to vector<16x128xf32>
    %387 = arith.mulf %386, %384 : vector<16x128xf32>
    %388 = arith.addf %358, %387 : vector<16x128xf32>
    %c92 = arith.constant 92 : index
    %389 = memref.load %arg2[%c92] : memref<98xf32, #tpu.memory_space<smem>>
    %390 = vector.broadcast %389 : f32 to vector<16x128xf32>
    %391 = arith.mulf %390, %384 : vector<16x128xf32>
    %392 = arith.addf %362, %391 : vector<16x128xf32>
    %c93 = arith.constant 93 : index
    %393 = memref.load %arg2[%c93] : memref<98xf32, #tpu.memory_space<smem>>
    %394 = vector.broadcast %393 : f32 to vector<16x128xf32>
    %395 = arith.mulf %394, %384 : vector<16x128xf32>
    %396 = arith.addf %366, %395 : vector<16x128xf32>
    %c94 = arith.constant 94 : index
    %397 = memref.load %arg2[%c94] : memref<98xf32, #tpu.memory_space<smem>>
    %398 = vector.broadcast %397 : f32 to vector<16x128xf32>
    %399 = arith.mulf %398, %384 : vector<16x128xf32>
    %400 = arith.addf %370, %399 : vector<16x128xf32>
    %c95 = arith.constant 95 : index
    %401 = memref.load %arg2[%c95] : memref<98xf32, #tpu.memory_space<smem>>
    %402 = vector.broadcast %401 : f32 to vector<16x128xf32>
    %403 = arith.mulf %402, %384 : vector<16x128xf32>
    %404 = arith.addf %374, %403 : vector<16x128xf32>
    %c96 = arith.constant 96 : index
    %405 = memref.load %arg2[%c96] : memref<98xf32, #tpu.memory_space<smem>>
    %406 = vector.broadcast %405 : f32 to vector<16x128xf32>
    %407 = arith.mulf %406, %384 : vector<16x128xf32>
    %408 = arith.addf %378, %407 : vector<16x128xf32>
    %c97 = arith.constant 97 : index
    %409 = memref.load %arg2[%c97] : memref<98xf32, #tpu.memory_space<smem>>
    %410 = vector.broadcast %409 : f32 to vector<16x128xf32>
    %411 = arith.mulf %410, %384 : vector<16x128xf32>
    %412 = arith.addf %382, %411 : vector<16x128xf32>
    %cst = arith.constant 0.000000e+00 : f32
    %413 = vector.broadcast %cst : f32 to vector<6x16x128xf32>
    %c0_56 = arith.constant 0 : index
    %c0_57 = arith.constant 0 : index
    %c128 = arith.constant 128 : index
    %414 = vector.load %arg6[%c0_56, %c0_57, %c128] : memref<6x16x256xf32, #tpu.memory_space<vmem>>, vector<6x16x128xf32>
    tpu.vector_store %arg6[%c0_56, %c0_57, %c128], %413 {strides = array<i32>} : memref<6x16x256xf32, #tpu.memory_space<vmem>>, vector<6x16x128xf32>,
    %c0_58 = arith.constant 0 : index
    %c0_59 = arith.constant 0 : index
    %c0_60 = arith.constant 0 : index
    %415 = vector.load %arg6[%c0_58, %c0_59, %c0_60] : memref<6x16x256xf32, #tpu.memory_space<vmem>>, vector<1x16x128xf32>
    %416 = vector.shape_cast %415 : vector<1x16x128xf32> to vector<16x128xf32>
    %417 = vector.shape_cast %392 : vector<16x128xf32> to vector<1x16x128xf32>
    tpu.vector_store %arg6[%c0_58, %c0_59, %c0_60], %417 {strides = array<i32>} : memref<6x16x256xf32, #tpu.memory_space<vmem>>, vector<1x16x128xf32>,
    %c1_61 = arith.constant 1 : index
    %c0_62 = arith.constant 0 : index
    %c0_63 = arith.constant 0 : index
    %418 = vector.load %arg6[%c1_61, %c0_62, %c0_63] : memref<6x16x256xf32, #tpu.memory_space<vmem>>, vector<1x16x128xf32>
    %419 = vector.shape_cast %418 : vector<1x16x128xf32> to vector<16x128xf32>
    %420 = vector.shape_cast %396 : vector<16x128xf32> to vector<1x16x128xf32>
    tpu.vector_store %arg6[%c1_61, %c0_62, %c0_63], %420 {strides = array<i32>} : memref<6x16x256xf32, #tpu.memory_space<vmem>>, vector<1x16x128xf32>,
    %c2_64 = arith.constant 2 : index
    %c0_65 = arith.constant 0 : index
    %c0_66 = arith.constant 0 : index
    %421 = vector.load %arg6[%c2_64, %c0_65, %c0_66] : memref<6x16x256xf32, #tpu.memory_space<vmem>>, vector<1x16x128xf32>
    %422 = vector.shape_cast %421 : vector<1x16x128xf32> to vector<16x128xf32>
    %423 = vector.shape_cast %400 : vector<16x128xf32> to vector<1x16x128xf32>
    tpu.vector_store %arg6[%c2_64, %c0_65, %c0_66], %423 {strides = array<i32>} : memref<6x16x256xf32, #tpu.memory_space<vmem>>, vector<1x16x128xf32>,
    %c3_67 = arith.constant 3 : index
    %c0_68 = arith.constant 0 : index
    %c0_69 = arith.constant 0 : index
    %424 = vector.load %arg6[%c3_67, %c0_68, %c0_69] : memref<6x16x256xf32, #tpu.memory_space<vmem>>, vector<1x16x128xf32>
    %425 = vector.shape_cast %424 : vector<1x16x128xf32> to vector<16x128xf32>
    %426 = vector.shape_cast %404 : vector<16x128xf32> to vector<1x16x128xf32>
    tpu.vector_store %arg6[%c3_67, %c0_68, %c0_69], %426 {strides = array<i32>} : memref<6x16x256xf32, #tpu.memory_space<vmem>>, vector<1x16x128xf32>,
    %c4_70 = arith.constant 4 : index
    %c0_71 = arith.constant 0 : index
    %c0_72 = arith.constant 0 : index
    %427 = vector.load %arg6[%c4_70, %c0_71, %c0_72] : memref<6x16x256xf32, #tpu.memory_space<vmem>>, vector<1x16x128xf32>
    %428 = vector.shape_cast %427 : vector<1x16x128xf32> to vector<16x128xf32>
    %429 = vector.shape_cast %408 : vector<16x128xf32> to vector<1x16x128xf32>
    tpu.vector_store %arg6[%c4_70, %c0_71, %c0_72], %429 {strides = array<i32>} : memref<6x16x256xf32, #tpu.memory_space<vmem>>, vector<1x16x128xf32>,
    %c5_73 = arith.constant 5 : index
    %c0_74 = arith.constant 0 : index
    %c0_75 = arith.constant 0 : index
    %430 = vector.load %arg6[%c5_73, %c0_74, %c0_75] : memref<6x16x256xf32, #tpu.memory_space<vmem>>, vector<1x16x128xf32>
    %431 = vector.shape_cast %430 : vector<1x16x128xf32> to vector<16x128xf32>
    %432 = vector.shape_cast %412 : vector<16x128xf32> to vector<1x16x128xf32>
    tpu.vector_store %arg6[%c5_73, %c0_74, %c0_75], %432 {strides = array<i32>} : memref<6x16x256xf32, #tpu.memory_space<vmem>>, vector<1x16x128xf32>,
    %c0_76 = arith.constant 0 : index
    %c0_77 = arith.constant 0 : index
    %c1_78 = arith.constant 1 : index
    %433 = vector.load %arg6[%c0_76, %c0_77, %c1_78] : memref<6x16x256xf32, #tpu.memory_space<vmem>>, vector<1x16x128xf32>
    %434 = vector.shape_cast %433 : vector<1x16x128xf32> to vector<16x128xf32>
    %435 = arith.addf %388, %434 : vector<16x128xf32>
    %c1_79 = arith.constant 1 : index
    %c0_80 = arith.constant 0 : index
    %c2_81 = arith.constant 2 : index
    %436 = vector.load %arg6[%c1_79, %c0_80, %c2_81] : memref<6x16x256xf32, #tpu.memory_space<vmem>>, vector<1x16x128xf32>
    %437 = vector.shape_cast %436 : vector<1x16x128xf32> to vector<16x128xf32>
    %438 = arith.addf %435, %437 : vector<16x128xf32>
    %c2_82 = arith.constant 2 : index
    %c0_83 = arith.constant 0 : index
    %c3_84 = arith.constant 3 : index
    %439 = vector.load %arg6[%c2_82, %c0_83, %c3_84] : memref<6x16x256xf32, #tpu.memory_space<vmem>>, vector<1x16x128xf32>
    %440 = vector.shape_cast %439 : vector<1x16x128xf32> to vector<16x128xf32>
    %441 = arith.addf %438, %440 : vector<16x128xf32>
    %c3_85 = arith.constant 3 : index
    %c0_86 = arith.constant 0 : index
    %c4_87 = arith.constant 4 : index
    %442 = vector.load %arg6[%c3_85, %c0_86, %c4_87] : memref<6x16x256xf32, #tpu.memory_space<vmem>>, vector<1x16x128xf32>
    %443 = vector.shape_cast %442 : vector<1x16x128xf32> to vector<16x128xf32>
    %444 = arith.addf %441, %443 : vector<16x128xf32>
    %c4_88 = arith.constant 4 : index
    %c0_89 = arith.constant 0 : index
    %c5_90 = arith.constant 5 : index
    %445 = vector.load %arg6[%c4_88, %c0_89, %c5_90] : memref<6x16x256xf32, #tpu.memory_space<vmem>>, vector<1x16x128xf32>
    %446 = vector.shape_cast %445 : vector<1x16x128xf32> to vector<16x128xf32>
    %447 = arith.addf %444, %446 : vector<16x128xf32>
    %c5_91 = arith.constant 5 : index
    %c0_92 = arith.constant 0 : index
    %c6_93 = arith.constant 6 : index
    %448 = vector.load %arg6[%c5_91, %c0_92, %c6_93] : memref<6x16x256xf32, #tpu.memory_space<vmem>>, vector<1x16x128xf32>
    %449 = vector.shape_cast %448 : vector<1x16x128xf32> to vector<16x128xf32>
    %450 = arith.addf %447, %449 : vector<16x128xf32>
    %c0_94 = arith.constant 0 : index
    %451 = memref.load %arg3[%c0_94] : memref<1xf32, #tpu.memory_space<smem>>
    %452 = vector.broadcast %451 : f32 to vector<16x128xf32>
    %453 = arith.addf %450, %452 : vector<16x128xf32>
    %c0_95 = arith.constant 0 : index
    %c0_96 = arith.constant 0 : index
    %c0_97 = arith.constant 0 : index
    %c0_98 = arith.constant 0 : index
    %454 = vector.load %arg5[%c0_95, %c0_96, %c0_97, %c0_98] : memref<1x1x16x128xf32, #tpu.memory_space<vmem>>, vector<1x1x16x128xf32>
    %455 = vector.shape_cast %454 : vector<1x1x16x128xf32> to vector<16x128xf32>
    %456 = vector.shape_cast %453 : vector<16x128xf32> to vector<1x1x16x128xf32>
    tpu.vector_store %arg5[%c0_95, %c0_96, %c0_97, %c0_98], %456 {strides = array<i32>} : memref<1x1x16x128xf32, #tpu.memory_space<vmem>>, vector<1x1x16x128xf32>,
    return
  }
  func.func @transform_0(%arg0: i32, %arg1: i32) -> i32 {
    %c0_i32 = arith.constant 0 : i32
    %c0_i32_0 = arith.constant 0 : i32
    return %c0_i32 : i32
  }
  func.func @transform_1(%arg0: i32, %arg1: i32) -> i32 {
    %c0_i32 = arith.constant 0 : i32
    %c0_i32_0 = arith.constant 0 : i32
    return %c0_i32 : i32
  }
  func.func @transform_2(%arg0: i32, %arg1: i32) -> (i32, i32, i32, i32) {
    %c0_i32 = arith.constant 0 : i32
    %c0_i32_0 = arith.constant 0 : i32
    %c0_i32_1 = arith.constant 0 : i32
    return %arg0, %arg1, %c0_i32, %c0_i32_0 : i32, i32, i32, i32
  }
  func.func @transform_3(%arg0: i32, %arg1: i32) -> (i32, i32, i32, i32) {
    %c0_i32 = arith.constant 0 : i32
    %c0_i32_0 = arith.constant 0 : i32
    %c0_i32_1 = arith.constant 0 : i32
    return %arg0, %c0_i32, %arg1, %c0_i32_0 : i32, i32, i32, i32
  }
}

</mosaic_0001>

<llo_original>
// kernel: _forward.2
$region0: #{_forward.2}
  #allocation0 [shape = 'u32[]', space=smem, size = 0x4, offset = 0x4, fixed_abs, tag = 'smem constant byte address 0x4 - core index']
  #allocation1 [shape = 'u32[144,128]{1,0:T(1,128)}', space=vmem, size = 0x12000, scoped, tag = 'internal scratch']
  #allocation2 [shape = 'f32[2,128]{1,0:T(2,128)}', space=vmem, size = 0x400, scoped, tag = 'scratch operand']
  #allocation3 [shape = 'f32[2,128]{1,0:T(2,128)}', space=vmem, size = 0x400, scoped, tag = 'scratch operand']
  %s0 = inlined_call_operand.vmem [shape: f32[2,4,2,128], index: 0, kind: input, shape index: {}]
  %s1 = inlined_call_operand.vmem [shape: f32[2,2,2,128], index: 1, kind: output, shape index: {}]
  %s2 = sld [smem:[#allocation0]]
  $region45: #{_forward.2} parent=0
    _
  %s4 = ssub.s32 1, %s2
  %s5 = scalar_select 0, %s4, %s2
  loop: start=0, step=1, limit=4
  $region2: #{_forward.2} parent=0 // loop_pre_header
    _
  $region3: #{_forward.2} parent=0 // loop_header
    %s7 = sphi 0, %s11
    %p8 = scmp.ge.s32.totalorder %s7, 4
    %s14 = sphi 0, %s33
    %s15 = sphi 0, %s29
    %s16 = sphi 0, %s25
    %s17 = sphi 0, %s14
    %s18 = sphi 0, %s15
    %s19 = sphi 0, %s16
    %s20 = sphi 0, %s17
    %s21 = sphi 0, %s18
    %s22 = sphi 0, %s19
    %s40 = sphi 0, %s42
    %s43 = sphi 0, %s40
    %s44 = sphi 0, %s43
    %s60 = sphi 0, %s44
    %s68 = sphi 0, %s70
    %s71 = sphi 0, %s68
    %s72 = sphi 0, %s71
    %s88 = sphi 0, %s72
  $region4: #{_forward.2} parent=0 // loop_header_branch
    %10 = sbr.rel (%p8) target = $region8
  $region5: #{_forward.2} parent=0 // loop_body
    %s12 = ssub.s32 %s7, 1
    %s13 = ssub.s32 %s7, 2
    %s23 = sadd.s32 1, %s16
    %p24 = scmp.ge.s32.totalorder %s23, 1
    %s25 = scalar_select %p24, 0, %s23
    %s26 = sadd.s32 1, %s15
    %s27 = scalar_select %p24, %s26, %s15
    %p28 = scmp.ge.s32.totalorder %s27, 1
    %s29 = scalar_select %p28, 0, %s27
    %s30 = sadd.s32 1, %s14
    %s31 = scalar_select %p28, %s30, %s14
    %p32 = scmp.ge.s32.totalorder %s31, 2
    %s33 = scalar_select %p32, 0, %s31
    %s34 = ssub.s32 %s14, %s33
    %s35 = ssub.s32 %s16, %s25
    %s36 = sor.u32 %s34, %s35
    %s37 = ssub.s32 %s15, %s29
    %s38 = sor.u32 %s36, %s37
    %p39 = scmp.eq.s32.totalorder %s38, 0
    %s41 = sadd.s32 %s40, 1
    %s42 = scalar_select %p39, %s40, %s41
    %p45 = pneg %p39
    %p46 = scmp.eq.s32.totalorder %s7, 1
    %p47 = por %p45, %p46
    %p48 = scmp.ne.s32.totalorder %s40, %s43
    %p49 = scmp.eq.s32.totalorder %s7, 0
    %p50 = por %p48, %p49
    %p51 = scmp.ne.s32.totalorder %s40, %s43
    %p52 = scmp.eq.s32.totalorder %s12, 1
    %p53 = por %p51, %p52
    %p54 = scmp.ne.s32.totalorder %s43, %s44
    %p55 = scmp.eq.s32.totalorder %s12, 0
    %p56 = por %p54, %p55
    %p57 = scmp.ne.s32.totalorder %s43, %s44
    %p58 = scmp.eq.s32.totalorder %s13, 1
    %p59 = por %p57, %p58
    %p61 = scmp.ne.s32.totalorder %s44, %s60
    %p62 = scmp.eq.s32.totalorder %s13, 0
    %p63 = por %p61, %p62
    %s64 = ssub.s32 %s14, %s33
    %s65 = ssub.s32 %s15, %s29
    %s66 = sor.u32 %s64, %s65
    %p67 = scmp.eq.s32.totalorder %s66, 0
    %s69 = sadd.s32 %s68, 1
    %s70 = scalar_select %p67, %s68, %s69
    %p73 = pneg %p67
    %p74 = scmp.eq.s32.totalorder %s7, 1
    %p75 = por %p73, %p74
    %p76 = scmp.ne.s32.totalorder %s68, %s71
    %p77 = scmp.eq.s32.totalorder %s7, 0
    %p78 = por %p76, %p77
    %p79 = scmp.ne.s32.totalorder %s68, %s71
    %p80 = scmp.eq.s32.totalorder %s12, 1
    %p81 = por %p79, %p80
    %p82 = scmp.ne.s32.totalorder %s71, %s72
    %p83 = scmp.eq.s32.totalorder %s12, 0
    %p84 = por %p82, %p83
    %p85 = scmp.ne.s32.totalorder %s71, %s72
    %p86 = scmp.eq.s32.totalorder %s13, 1
    %p87 = por %p85, %p86
    %p89 = scmp.ne.s32.totalorder %s72, %s88
    %p90 = scmp.eq.s32.totalorder %s13, 0
    %p91 = por %p89, %p90
    %p92 = scmp.le.s32.totalorder 1, %s7
    %p93 = scmp.lt.s32.totalorder %s7, 3
    %p94 = pnand %p92, %p93
    %p95 = pneg %p94
    // Predicated region
    $region9: #{_forward.2} parent=5 // pred_check
      _
    $region10: #{_forward.2} parent=5 // pred_check_branch
      %97 = sbr.rel (%p94) target = $region12
    $region11: #{_forward.2} parent=5 // pred_region
      %s98 = ssub.s32 %s7, 1
    $region12: #{_forward.2} parent=5 // pred_fallthru
      _
    %p99 = scmp.lt.s32.totalorder %s7, 2
    // Predicated region
    $region13: #{_forward.2} parent=5 // pred_check
      %p100 = pneg %p99
    $region14: #{_forward.2} parent=5 // pred_check_branch
      %102 = sbr.rel (%p100) target = $region16
    $region15: #{_forward.2} parent=5 // pred_region
      // Predicated region
      $region17: #{_forward.2} parent=15 // pred_check
        %p103 = pneg %p50
      $region18: #{_forward.2} parent=15 // pred_check_branch
        %105 = sbr.rel (%p103) target = $region20
      $region19: #{_forward.2} parent=15 // pred_region
        %s106 = smul.u32 4, %s16
        %p107 = scmp.lt.s32.totalorder %s14, 1
        %s108 = scalar_select %p107, %s14, 1
        %p109 = scmp.lt.s32.totalorder %s106, 3
        %s110 = scalar_select %p109, %s106, 3
        %p111 = scmp.lt.s32.totalorder %s15, 0
        %s112 = scalar_select %p111, %s15, 0
        %s113 = sadd.s32 %s112, %s110
        %s114 = smul.addr %s108, 4
        %s115 = sadd.s32 %s113, %s114
        %s116 = smul.addr %s115, 2
        %s117 = scalar_lea.vmem %s0, %s116
        %s118 = smul.u32 4, %s16
      $region20: #{_forward.2} parent=15 // pred_fallthru
        _
    $region16: #{_forward.2} parent=5 // pred_fallthru
      _
    %p119 = scmp.le.s32.totalorder 1, %s7
    %p120 = scmp.lt.s32.totalorder %s7, 3
    %p121 = pnand %p119, %p120
    %p122 = pneg %p121
    // Predicated region
    $region21: #{_forward.2} parent=5 // pred_check
      _
    $region22: #{_forward.2} parent=5 // pred_check_branch
      %124 = sbr.rel (%p121) target = $region24
    $region23: #{_forward.2} parent=5 // pred_region
      %s125 = ssub.s32 %s7, 1
      %s126 = smul.u32 4, %s19
      %p127 = scmp.lt.s32.totalorder %s17, 1
      %s128 = scalar_select %p127, %s17, 1
      %p129 = scmp.lt.s32.totalorder %s126, 3
      %s130 = scalar_select %p129, %s126, 3
      %p131 = scmp.lt.s32.totalorder %s18, 0
      %s132 = scalar_select %p131, %s18, 0
      %s133 = sadd.s32 %s132, %s130
      %s134 = smul.addr %s128, 4
      %s135 = sadd.s32 %s133, %s134
      %s136 = smul.addr %s135, 2
      %s137 = scalar_lea.vmem %s0, %s136
      %p138 = pneg %p56
      %p139 = pneg %p53
      %p140 = pneg %p84
      %p141 = pneg %p81
      %p142 = scmp.lt.s32.totalorder %s17, 1
      %s143 = scalar_select %p142, %s17, 1
      %p144 = scmp.lt.s32.totalorder %s18, 0
      %s145 = scalar_select %p144, %s18, 0
      %s146 = smul.addr %s143, 2
      %s147 = sadd.s32 %s145, %s146
      %s148 = smul.addr %s147, 2
      %s149 = scalar_lea.vmem %s1, %s148
      %s150 = smul.u32 4, %s19
      %p151 = scmp.lt.s32.totalorder %s17, 1
      %s152 = scalar_select %p151, %s17, 1
      %p153 = scmp.lt.s32.totalorder %s150, 3
      %s154 = scalar_select %p153, %s150, 3
      %p155 = scmp.lt.s32.totalorder %s18, 0
      %s156 = scalar_select %p155, %s18, 0
      %s157 = sadd.s32 %s156, %s154
      %s158 = smul.addr %s152, 4
      %s159 = sadd.s32 %s157, %s158
      %s160 = smul.addr %s159, 2
      %s161 = scalar_lea.vmem %s0, %s160
      %s162 = smul.u32 4, %s19
      %p163 = scmp.lt.s32.totalorder %s17, 1
      %s164 = scalar_select %p163, %s17, 1
      %p165 = scmp.lt.s32.totalorder %s18, 0
      %s166 = scalar_select %p165, %s18, 0
      %s167 = smul.addr %s164, 2
      %s168 = sadd.s32 %s166, %s167
      %s169 = smul.addr %s168, 2
      %s170 = scalar_lea.vmem %s1, %s169
      %p171 = scmp.eq.s32.totalorder %s19, 0
      // Predicated region
      $region25: #{_forward.2} parent=23 // pred_check
        %p172 = pneg %p171
      $region26: #{_forward.2} parent=23 // pred_check_branch
        %174 = sbr.rel (%p172) target = $region28
      $region27: #{_forward.2} parent=23 // pred_region
        %175 = vst [vmem:[#allocation2] sm:$0x3] 0.0
        %176 = vst [vmem:[#allocation3] sm:$0x3] -inf
      $region28: #{_forward.2} parent=23 // pred_fallthru
        _
      %v177 = vld [vmem:[%s161] sm:$0x3]
      %s178 = scalar_lea.vmem %s161, 2
      %v179 = vld [vmem:[%s178] sm:$0x3]
      %s180 = scalar_lea.vmem %s161, 4
      %v181 = vld [vmem:[%s180] sm:$0x3]
      %s182 = scalar_lea.vmem %s161, 6
      %v183 = vld [vmem:[%s182] sm:$0x3]
      %v184 = vadd.f32 %v177, %v179
      %v185 = vadd.f32 %v181, %v183
      %v186 = vadd.f32 %v184, %v185
      %v187 = vmax.f32 %v177, %v179
      %v188 = vmax.f32 %v181, %v183
      %v189 = vmax.f32 %v187, %v188
      %v190 = vld [vmem:[#allocation2] sm:$0x3]
      %v191 = vadd.f32 %v190, %v186
      %192 = vst [vmem:[#allocation2] sm:$0x3] %v191
      %v193 = vld [vmem:[#allocation3] sm:$0x3]
      %v194 = vmax.f32 %v193, %v189
      %195 = vst [vmem:[#allocation3] sm:$0x3] %v194
      // Predicated region
      $region29: #{_forward.2} parent=23 // pred_check
        %p196 = pneg %p171
      $region30: #{_forward.2} parent=23 // pred_check_branch
        %198 = sbr.rel (%p196) target = $region32
      $region31: #{_forward.2} parent=23 // pred_region
        %v199 = vld [vmem:[#allocation2] sm:$0x3]
        %v200 = vmul.f32 %v199, 0.25
        %201 = vst [vmem:[%s170] sm:$0x3] %v200
        %v202 = vld [vmem:[#allocation3] sm:$0x3]
        %s203 = scalar_lea.vmem %s170, 2
        %204 = vst [vmem:[%s203] sm:$0x3] %v202
      $region32: #{_forward.2} parent=23 // pred_fallthru
        _
      %p205 = scmp.lt.s32.totalorder %s17, 1
      %s206 = scalar_select %p205, %s17, 1
      %p207 = scmp.lt.s32.totalorder %s18, 0
      %s208 = scalar_select %p207, %s18, 0
      %s209 = smul.addr %s206, 2
      %s210 = sadd.s32 %s208, %s209
      %s211 = smul.addr %s210, 2
      %s212 = scalar_lea.vmem %s1, %s211
      // Predicated region
      $region33: #{_forward.2} parent=23 // pred_check
        %p213 = pneg %p81
      $region34: #{_forward.2} parent=23 // pred_check_branch
        %215 = sbr.rel (%p213) target = $region36
      $region35: #{_forward.2} parent=23 // pred_region
        _
      $region36: #{_forward.2} parent=23 // pred_fallthru
        _
    $region24: #{_forward.2} parent=5 // pred_fallthru
      _
    %p216 = scmp.le.s32.totalorder 2, %s7
    // Predicated region
    $region37: #{_forward.2} parent=5 // pred_check
      %p217 = pneg %p216
    $region38: #{_forward.2} parent=5 // pred_check_branch
      %219 = sbr.rel (%p217) target = $region40
    $region39: #{_forward.2} parent=5 // pred_region
      %s220 = ssub.s32 %s7, 2
      // Predicated region
      $region41: #{_forward.2} parent=39 // pred_check
        %p221 = pneg %p87
      $region42: #{_forward.2} parent=39 // pred_check_branch
        %223 = sbr.rel (%p221) target = $region44
      $region43: #{_forward.2} parent=39 // pred_region
        %p224 = scmp.lt.s32.totalorder %s20, 1
        %s225 = scalar_select %p224, %s20, 1
        %p226 = scmp.lt.s32.totalorder %s21, 0
        %s227 = scalar_select %p226, %s21, 0
        %s228 = smul.addr %s225, 2
        %s229 = sadd.s32 %s227, %s228
        %s230 = smul.addr %s229, 2
        %s231 = scalar_lea.vmem %s1, %s230
      $region44: #{_forward.2} parent=39 // pred_fallthru
        _
    $region40: #{_forward.2} parent=5 // pred_fallthru
      _
  $region6: #{_forward.2} parent=0 // loop_footer
    %s11 = sadd.s32 1, %s7
  $region7: #{_forward.2} parent=0 // loop_footer_branch
    %6 = sbr.rel target = $region3
  $region8: #{_forward.2} parent=0 // loop_exit
    _

// kernel: _forward.3
$region0: #{_forward.3}
  #allocation0 [shape = 'u32[]', space=smem, size = 0x4, offset = 0x4, fixed_abs, tag = 'smem constant byte address 0x4 - core index']
  #allocation1 [shape = 'u32[144,128]{1,0:T(1,128)}', space=vmem, size = 0x12000, scoped, tag = 'internal scratch']
  #allocation2 [shape = 'f32[6,16,256]{2,1,0:T(8,128)}', space=vmem, size = 0x18000, scoped, tag = 'scratch operand']
  #allocation3 [shape = 'f32[1]{0:T(128)S(6)}', space=smem, size = 0x200, scoped, tag = 'scoped memory for _forward.3']
  %s0 = inlined_call_operand.vmem [shape: f32[98], index: 0, kind: input, shape index: {}]
  %s1 = inlined_call_operand.<no memory space> [shape: f32[1], index: 1, kind: input, shape index: {}]
  %s2 = inlined_call_operand.vmem [shape: f32[2,1,44,128], index: 2, kind: input, shape index: {}]
  %s3 = inlined_call_operand.hbm [shape: f32[2,1,16,128], index: 3, kind: output, shape index: {}]
  %s4 = sld [smem:[#allocation0]]
  $region49: #{_forward.3} parent=0
    _
  %s6 = ssub.s32 1, %s4
  %s7 = scalar_select 0, %s6, %s4
  %8 = sst [smem:[#allocation3]] %s1
  $region1: #{_forward.3} parent=0
    #allocation4 [shape = 'u8[512]{0}', space=smem, size = 0x200, scoped, tag = 'input window, operand 0, single buffered']
    #allocation5 [shape = 's32[2]{0}', space=sflag, size = 0x8, scoped, tag = 'scoped memory for _forward.3']
    #allocation6 [shape = 's32[2]{0}', space=sflag, size = 0x8, scoped, tag = 'scoped memory for _forward.3']
    #allocation7 [shape = 'u8[16384]{0}', space=vmem, size = 0x4000, scoped, tag = 'output window, operand 0']
    %9 = vsyncpa [#allocation6], 0
    %10 = vsyncpa [#allocation5], 0
    %s11 = scalar_lea.sflag [#allocation5], 1
    %12 = vsyncpa %s11, 0
    loop: start=0, step=1, limit=4
    $region2: #{_forward.3} parent=1 // loop_pre_header
      _
    $region3: #{_forward.3} parent=1 // loop_header
      %s14 = sphi 0, %s18
      %p15 = scmp.ge.s32.totalorder %s14, 4
      %s21 = sphi 0, %s33
      %s22 = sphi 0, %s29
      %s23 = sphi 0, %s21
      %s24 = sphi 0, %s22
      %s25 = sphi 0, %s23
      %s26 = sphi 0, %s24
      %s34 = sphi 0, %s34
      %s36 = sphi 0, %s34
      %s37 = sphi 0, %s36
      %s51 = sphi 0, %s37
      %s55 = sphi 0, %s55
      %s57 = sphi 0, %s55
      %s58 = sphi 0, %s57
      %s72 = sphi 0, %s58
      %s80 = sphi 0, %s82
      %s83 = sphi 0, %s80
      %s84 = sphi 0, %s83
      %s100 = sphi 0, %s84
      %s108 = sphi 0, %s110
      %s111 = sphi 0, %s108
      %s112 = sphi 0, %s111
      %s128 = sphi 0, %s112
    $region4: #{_forward.3} parent=1 // loop_header_branch
      %17 = sbr.rel (%p15) target = $region8
    $region5: #{_forward.3} parent=1 // loop_body
      %s19 = ssub.s32 %s14, 1
      %s20 = ssub.s32 %s14, 2
      %s27 = sadd.s32 1, %s22
      %p28 = scmp.ge.s32.totalorder %s27, 1
      %s29 = scalar_select %p28, 0, %s27
      %s30 = sadd.s32 1, %s21
      %s31 = scalar_select %p28, %s30, %s21
      %p32 = scmp.ge.s32.totalorder %s31, 2
      %s33 = scalar_select %p32, 0, %s31
      %s35 = sadd.s32 %s34, 1
      %p38 = scmp.eq.s32.totalorder %s14, 1
      %p39 = scmp.ne.s32.totalorder %s34, %s36
      %p40 = scmp.eq.s32.totalorder %s14, 0
      %p41 = por %p39, %p40
      %p42 = scmp.ne.s32.totalorder %s34, %s36
      %p43 = scmp.eq.s32.totalorder %s19, 1
      %p44 = por %p42, %p43
      %p45 = scmp.ne.s32.totalorder %s36, %s37
      %p46 = scmp.eq.s32.totalorder %s19, 0
      %p47 = por %p45, %p46
      %p48 = scmp.ne.s32.totalorder %s36, %s37
      %p49 = scmp.eq.s32.totalorder %s20, 1
      %p50 = por %p48, %p49
      %p52 = scmp.ne.s32.totalorder %s37, %s51
      %p53 = scmp.eq.s32.totalorder %s20, 0
      %p54 = por %p52, %p53
      %s56 = sadd.s32 %s55, 1
      %p59 = scmp.eq.s32.totalorder %s14, 1
      %p60 = scmp.ne.s32.totalorder %s55, %s57
      %p61 = scmp.eq.s32.totalorder %s14, 0
      %p62 = por %p60, %p61
      %p63 = scmp.ne.s32.totalorder %s55, %s57
      %p64 = scmp.eq.s32.totalorder %s19, 1
      %p65 = por %p63, %p64
      %p66 = scmp.ne.s32.totalorder %s57, %s58
      %p67 = scmp.eq.s32.totalorder %s19, 0
      %p68 = por %p66, %p67
      %p69 = scmp.ne.s32.totalorder %s57, %s58
      %p70 = scmp.eq.s32.totalorder %s20, 1
      %p71 = por %p69, %p70
      %p73 = scmp.ne.s32.totalorder %s58, %s72
      %p74 = scmp.eq.s32.totalorder %s20, 0
      %p75 = por %p73, %p74
      %s76 = ssub.s32 %s21, %s33
      %s77 = ssub.s32 %s22, %s29
      %s78 = sor.u32 %s76, %s77
      %p79 = scmp.eq.s32.totalorder %s78, 0
      %s81 = sadd.s32 %s80, 1
      %s82 = scalar_select %p79, %s80, %s81
      %p85 = pneg %p79
      %p86 = scmp.eq.s32.totalorder %s14, 1
      %p87 = por %p85, %p86
      %p88 = scmp.ne.s32.totalorder %s80, %s83
      %p89 = scmp.eq.s32.totalorder %s14, 0
      %p90 = por %p88, %p89
      %p91 = scmp.ne.s32.totalorder %s80, %s83
      %p92 = scmp.eq.s32.totalorder %s19, 1
      %p93 = por %p91, %p92
      %p94 = scmp.ne.s32.totalorder %s83, %s84
      %p95 = scmp.eq.s32.totalorder %s19, 0
      %p96 = por %p94, %p95
      %p97 = scmp.ne.s32.totalorder %s83, %s84
      %p98 = scmp.eq.s32.totalorder %s20, 1
      %p99 = por %p97, %p98
      %p101 = scmp.ne.s32.totalorder %s84, %s100
      %p102 = scmp.eq.s32.totalorder %s20, 0
      %p103 = por %p101, %p102
      %s104 = ssub.s32 %s21, %s33
      %s105 = ssub.s32 %s22, %s29
      %s106 = sor.u32 %s104, %s105
      %p107 = scmp.eq.s32.totalorder %s106, 0
      %s109 = sadd.s32 %s108, 1
      %s110 = scalar_select %p107, %s108, %s109
      %p113 = pneg %p107
      %p114 = scmp.eq.s32.totalorder %s14, 1
      %p115 = por %p113, %p114
      %p116 = scmp.ne.s32.totalorder %s108, %s111
      %p117 = scmp.eq.s32.totalorder %s14, 0
      %p118 = por %p116, %p117
      %p119 = scmp.ne.s32.totalorder %s108, %s111
      %p120 = scmp.eq.s32.totalorder %s19, 1
      %p121 = por %p119, %p120
      %p122 = scmp.ne.s32.totalorder %s111, %s112
      %p123 = scmp.eq.s32.totalorder %s19, 0
      %p124 = por %p122, %p123
      %p125 = scmp.ne.s32.totalorder %s111, %s112
      %p126 = scmp.eq.s32.totalorder %s20, 1
      %p127 = por %p125, %p126
      %p129 = scmp.ne.s32.totalorder %s112, %s128
      %p130 = scmp.eq.s32.totalorder %s20, 0
      %p131 = por %p129, %p130
      %p132 = scmp.le.s32.totalorder 1, %s14
      %p133 = scmp.lt.s32.totalorder %s14, 3
      %p134 = pnand %p132, %p133
      %p135 = pneg %p134
      // Predicated region
      $region9: #{_forward.3} parent=5 // pred_check
        _
      $region10: #{_forward.3} parent=5 // pred_check_branch
        %137 = sbr.rel (%p134) target = $region12
      $region11: #{_forward.3} parent=5 // pred_region
        %s138 = ssub.s32 %s14, 1
        // Predicated region
        $region13: #{_forward.3} parent=11 // pred_check
          %p139 = pneg %p47
        $region14: #{_forward.3} parent=11 // pred_check_branch
          %141 = sbr.rel (%p139) target = $region16
        $region15: #{_forward.3} parent=11 // pred_region
          %s143 = ssub.s32 16, 16
          %144 = vsyncadd [#allocation6], %s143
          %s146 = sshll.u32 %s0, 4
          %s147 = int_to_ptr.vmem [resolvable:$true] %s146
          %149 = dma.vmem_to_smem %s147, 16, [#allocation4], [#allocation6]
        $region16: #{_forward.3} parent=11 // pred_fallthru
          _
        // Predicated region
        $region17: #{_forward.3} parent=11 // pred_check
          %p150 = pneg %p68
        $region18: #{_forward.3} parent=11 // pred_check_branch
          %152 = sbr.rel (%p150) target = $region20
        $region19: #{_forward.3} parent=11 // pred_region
          _
        $region20: #{_forward.3} parent=11 // pred_fallthru
          _
      $region12: #{_forward.3} parent=5 // pred_fallthru
        _
      %p153 = scmp.lt.s32.totalorder %s14, 2
      // Predicated region
      $region21: #{_forward.3} parent=5 // pred_check
        %p154 = pneg %p153
      $region22: #{_forward.3} parent=5 // pred_check_branch
        %156 = sbr.rel (%p154) target = $region24
      $region23: #{_forward.3} parent=5 // pred_region
        // Predicated region
        $region25: #{_forward.3} parent=23 // pred_check
          %p157 = pneg %p90
        $region26: #{_forward.3} parent=23 // pred_check_branch
          %159 = sbr.rel (%p157) target = $region28
        $region27: #{_forward.3} parent=23 // pred_region
          %p160 = scmp.lt.s32.totalorder %s21, 1
          %s161 = scalar_select %p160, %s21, 1
          %p162 = scmp.lt.s32.totalorder %s22, 0
          %s163 = scalar_select %p162, %s22, 0
          %s164 = smul.addr %s163, 6
          %s165 = smul.addr %s161, 6
          %s166 = sadd.s32 %s164, %s165
          %s167 = smul.addr %s166, 8
          %s168 = scalar_lea.vmem %s2, %s167
        $region28: #{_forward.3} parent=23 // pred_fallthru
          _
      $region24: #{_forward.3} parent=5 // pred_fallthru
        _
      %p169 = scmp.le.s32.totalorder 1, %s14
      %p170 = scmp.lt.s32.totalorder %s14, 3
      %p171 = pnand %p169, %p170
      %p172 = pneg %p171
      // Predicated region
      $region29: #{_forward.3} parent=5 // pred_check
        _
      $region30: #{_forward.3} parent=5 // pred_check_branch
        %174 = sbr.rel (%p171) target = $region32
      $region31: #{_forward.3} parent=5 // pred_region
        %s175 = ssub.s32 %s14, 1
        // Predicated region
        $region33: #{_forward.3} parent=31 // pred_check
          %p176 = pneg %p47
        $region34: #{_forward.3} parent=31 // pred_check_branch
          %178 = sbr.rel (%p176) target = $region36
        $region35: #{_forward.3} parent=31 // pred_region
          %179 = dma.done [#allocation6], 16
        $region36: #{_forward.3} parent=31 // pred_fallthru
          _
        %180 = sfence
        %p181 = pneg %p47
        %p182 = pneg %p44
        %p183 = pneg %p68
        %p184 = pneg %p65
        %p185 = scmp.lt.s32.totalorder %s23, 1
        %s186 = scalar_select %p185, %s23, 1
        %p187 = scmp.lt.s32.totalorder %s24, 0
        %s188 = scalar_select %p187, %s24, 0
        %s189 = smul.addr %s188, 6
        %s190 = smul.addr %s186, 6
        %s191 = sadd.s32 %s189, %s190
        %s192 = smul.addr %s191, 8
        %s193 = scalar_lea.vmem %s2, %s192
        %p194 = pneg %p96
        %p195 = pneg %p93
        %p196 = pneg %p124
        %p197 = pneg %p121
        %s198 = sand.u32 %s111, 1
        %s199 = scalar_lea.sflag [#allocation5], %s198
        %s200 = sand.u32 %s111, 1
        %s201 = smul.addr %s200, 16
        %s202 = scalar_lea.vmem [#allocation7], %s201
        %p203 = scmp.lt.s32.totalorder %s23, 1
        %s204 = scalar_select %p203, %s23, 1
        %p205 = scmp.lt.s32.totalorder %s24, 0
        %s206 = scalar_select %p205, %s24, 0
        %s207 = smul.addr %s206, 6
        %s208 = smul.addr %s204, 6
        %s209 = sadd.s32 %s207, %s208
        %s210 = smul.addr %s209, 8
        %s211 = scalar_lea.vmem %s2, %s210
        %s212 = smul.u32 2, %s24
        %v213 = vld [vmem:[%s211] sm:$0xff]
        %v214 = vld [vmem:[%s211 + $0x8] sm:$0xff]
        %s215 = sld [smem:[#allocation4]]
        %v216 = vstv %s215
        %v217 = vmul.f32 %v216, %v213
        %v218 = vmul.f32 %v216, %v214
        %s219 = sld [smem:[#allocation4 + $0x1]]
        %v220 = vstv %s219
        %v221 = vmul.f32 %v220, %v213
        %v222 = vmul.f32 %v220, %v214
        %s223 = sld [smem:[#allocation4 + $0x2]]
        %v224 = vstv %s223
        %v225 = vmul.f32 %v224, %v213
        %v226 = vmul.f32 %v224, %v214
        %s227 = sld [smem:[#allocation4 + $0x3]]
        %v228 = vstv %s227
        %v229 = vmul.f32 %v228, %v213
        %v230 = vmul.f32 %v228, %v214
        %s231 = sld [smem:[#allocation4 + $0x4]]
        %v232 = vstv %s231
        %v233 = vmul.f32 %v232, %v213
        %v234 = vmul.f32 %v232, %v214
        %s235 = sld [smem:[#allocation4 + $0x5]]
        %v236 = vstv %s235
        %v237 = vmul.f32 %v236, %v213
        %v238 = vmul.f32 %v236, %v214
        %s239 = sld [smem:[#allocation4 + $0x6]]
        %v240 = vstv %s239
        %v241 = vmul.f32 %v240, %v213
        %v242 = vmul.f32 %v240, %v214
        %v243 = vld [vmem:[%s211 + $0x1] sm:$0xff]
        %v244 = vld [vmem:[%s211 + $0x9] sm:$0xff]
        %s245 = sld [smem:[#allocation4 + $0x7]]
        %v246 = vstv %s245
        %v247 = vmul.f32 %v246, %v243
        %v248 = vmul.f32 %v246, %v244
        %v249 = vadd.f32 %v217, %v247
        %v250 = vadd.f32 %v218, %v248
        %s251 = sld [smem:[#allocation4 + $0x8]]
        %v252 = vstv %s251
        %v253 = vmul.f32 %v252, %v243
        %v254 = vmul.f32 %v252, %v244
        %v255 = vadd.f32 %v221, %v253
        %v256 = vadd.f32 %v222, %v254
        %s257 = sld [smem:[#allocation4 + $0x9]]
        %v258 = vstv %s257
        %v259 = vmul.f32 %v258, %v243
        %v260 = vmul.f32 %v258, %v244
        %v261 = vadd.f32 %v225, %v259
        %v262 = vadd.f32 %v226, %v260
        %s263 = sld [smem:[#allocation4 + $0xa]]
        %v264 = vstv %s263
        %v265 = vmul.f32 %v264, %v243
        %v266 = vmul.f32 %v264, %v244
        %v267 = vadd.f32 %v229, %v265
        %v268 = vadd.f32 %v230, %v266
        %s269 = sld [smem:[#allocation4 + $0xb]]
        %v270 = vstv %s269
        %v271 = vmul.f32 %v270, %v243
        %v272 = vmul.f32 %v270, %v244
        %v273 = vadd.f32 %v233, %v271
        %v274 = vadd.f32 %v234, %v272
        %s275 = sld [smem:[#allocation4 + $0xc]]
        %v276 = vstv %s275
        %v277 = vmul.f32 %v276, %v243
        %v278 = vmul.f32 %v276, %v244
        %v279 = vadd.f32 %v237, %v277
        %v280 = vadd.f32 %v238, %v278
        %s281 = sld [smem:[#allocation4 + $0xd]]
        %v282 = vstv %s281
        %v283 = vmul.f32 %v282, %v243
        %v284 = vmul.f32 %v282, %v244
        %v285 = vadd.f32 %v241, %v283
        %v286 = vadd.f32 %v242, %v284
        %v287 = vld [vmem:[%s211 + $0x2] sm:$0xff]
        %v288 = vld [vmem:[%s211 + $0xa] sm:$0xff]
        %s289 = sld [smem:[#allocation4 + $0xe]]
        %v290 = vstv %s289
        %v291 = vmul.f32 %v290, %v287
        %v292 = vmul.f32 %v290, %v288
        %v293 = vadd.f32 %v249, %v291
        %v294 = vadd.f32 %v250, %v292
        %s295 = sld [smem:[#allocation4 + $0xf]]
        %v296 = vstv %s295
        %v297 = vmul.f32 %v296, %v287
        %v298 = vmul.f32 %v296, %v288
        %v299 = vadd.f32 %v255, %v297
        %v300 = vadd.f32 %v256, %v298
        %s301 = sld [smem:[#allocation4 + $0x10]]
        %v302 = vstv %s301
        %v303 = vmul.f32 %v302, %v287
        %v304 = vmul.f32 %v302, %v288
        %v305 = vadd.f32 %v261, %v303
        %v306 = vadd.f32 %v262, %v304
        %s307 = sld [smem:[#allocation4 + $0x11]]
        %v308 = vstv %s307
        %v309 = vmul.f32 %v308, %v287
        %v310 = vmul.f32 %v308, %v288
        %v311 = vadd.f32 %v267, %v309
        %v312 = vadd.f32 %v268, %v310
        %s313 = sld [smem:[#allocation4 + $0x12]]
        %v314 = vstv %s313
        %v315 = vmul.f32 %v314, %v287
        %v316 = vmul.f32 %v314, %v288
        %v317 = vadd.f32 %v273, %v315
        %v318 = vadd.f32 %v274, %v316
        %s319 = sld [smem:[#allocation4 + $0x13]]
        %v320 = vstv %s319
        %v321 = vmul.f32 %v320, %v287
        %v322 = vmul.f32 %v320, %v288
        %v323 = vadd.f32 %v279, %v321
        %v324 = vadd.f32 %v280, %v322
        %s325 = sld [smem:[#allocation4 + $0x14]]
        %v326 = vstv %s325
        %v327 = vmul.f32 %v326, %v287
        %v328 = vmul.f32 %v326, %v288
        %v329 = vadd.f32 %v285, %v327
        %v330 = vadd.f32 %v286, %v328
        %v331 = vld [vmem:[%s211 + $0x3] sm:$0xff]
        %v332 = vld [vmem:[%s211 + $0xb] sm:$0xff]
        %s333 = sld [smem:[#allocation4 + $0x15]]
        %v334 = vstv %s333
        %v335 = vmul.f32 %v334, %v331
        %v336 = vmul.f32 %v334, %v332
        %v337 = vadd.f32 %v293, %v335
        %v338 = vadd.f32 %v294, %v336
        %s339 = sld [smem:[#allocation4 + $0x16]]
        %v340 = vstv %s339
        %v341 = vmul.f32 %v340, %v331
        %v342 = vmul.f32 %v340, %v332
        %v343 = vadd.f32 %v299, %v341
        %v344 = vadd.f32 %v300, %v342
        %s345 = sld [smem:[#allocation4 + $0x17]]
        %v346 = vstv %s345
        %v347 = vmul.f32 %v346, %v331
        %v348 = vmul.f32 %v346, %v332
        %v349 = vadd.f32 %v305, %v347
        %v350 = vadd.f32 %v306, %v348
        %s351 = sld [smem:[#allocation4 + $0x18]]
        %v352 = vstv %s351
        %v353 = vmul.f32 %v352, %v331
        %v354 = vmul.f32 %v352, %v332
        %v355 = vadd.f32 %v311, %v353
        %v356 = vadd.f32 %v312, %v354
        %s357 = sld [smem:[#allocation4 + $0x19]]
        %v358 = vstv %s357
        %v359 = vmul.f32 %v358, %v331
        %v360 = vmul.f32 %v358, %v332
        %v361 = vadd.f32 %v317, %v359
        %v362 = vadd.f32 %v318, %v360
        %s363 = sld [smem:[#allocation4 + $0x1a]]
        %v364 = vstv %s363
        %v365 = vmul.f32 %v364, %v331
        %v366 = vmul.f32 %v364, %v332
        %v367 = vadd.f32 %v323, %v365
        %v368 = vadd.f32 %v324, %v366
        %s369 = sld [smem:[#allocation4 + $0x1b]]
        %v370 = vstv %s369
        %v371 = vmul.f32 %v370, %v331
        %v372 = vmul.f32 %v370, %v332
        %v373 = vadd.f32 %v329, %v371
        %v374 = vadd.f32 %v330, %v372
        %v375 = vld [vmem:[%s211 + $0x4] sm:$0xff]
        %v376 = vld [vmem:[%s211 + $0xc] sm:$0xff]
        %s377 = sld [smem:[#allocation4 + $0x1c]]
        %v378 = vstv %s377
        %v379 = vmul.f32 %v378, %v375
        %v380 = vmul.f32 %v378, %v376
        %v381 = vadd.f32 %v337, %v379
        %v382 = vadd.f32 %v338, %v380
        %s383 = sld [smem:[#allocation4 + $0x1d]]
        %v384 = vstv %s383
        %v385 = vmul.f32 %v384, %v375
        %v386 = vmul.f32 %v384, %v376
        %v387 = vadd.f32 %v343, %v385
        %v388 = vadd.f32 %v344, %v386
        %s389 = sld [smem:[#allocation4 + $0x1e]]
        %v390 = vstv %s389
        %v391 = vmul.f32 %v390, %v375
        %v392 = vmul.f32 %v390, %v376
        %v393 = vadd.f32 %v349, %v391
        %v394 = vadd.f32 %v350, %v392
        %s395 = sld [smem:[#allocation4 + $0x1f]]
        %v396 = vstv %s395
        %v397 = vmul.f32 %v396, %v375
        %v398 = vmul.f32 %v396, %v376
        %v399 = vadd.f32 %v355, %v397
        %v400 = vadd.f32 %v356, %v398
        %s401 = sld [smem:[#allocation4 + $0x20]]
        %v402 = vstv %s401
        %v403 = vmul.f32 %v402, %v375
        %v404 = vmul.f32 %v402, %v376
        %v405 = vadd.f32 %v361, %v403
        %v406 = vadd.f32 %v362, %v404
        %s407 = sld [smem:[#allocation4 + $0x21]]
        %v408 = vstv %s407
        %v409 = vmul.f32 %v408, %v375
        %v410 = vmul.f32 %v408, %v376
        %v411 = vadd.f32 %v367, %v409
        %v412 = vadd.f32 %v368, %v410
        %s413 = sld [smem:[#allocation4 + $0x22]]
        %v414 = vstv %s413
        %v415 = vmul.f32 %v414, %v375
        %v416 = vmul.f32 %v414, %v376
        %v417 = vadd.f32 %v373, %v415
        %v418 = vadd.f32 %v374, %v416
        %v419 = vld [vmem:[%s211 + $0x5] sm:$0xff]
        %v420 = vld [vmem:[%s211 + $0xd] sm:$0xff]
        %s421 = sld [smem:[#allocation4 + $0x23]]
        %v422 = vstv %s421
        %v423 = vmul.f32 %v422, %v419
        %v424 = vmul.f32 %v422, %v420
        %v425 = vadd.f32 %v381, %v423
        %v426 = vadd.f32 %v382, %v424
        %s427 = sld [smem:[#allocation4 + $0x24]]
        %v428 = vstv %s427
        %v429 = vmul.f32 %v428, %v419
        %v430 = vmul.f32 %v428, %v420
        %v431 = vadd.f32 %v387, %v429
        %v432 = vadd.f32 %v388, %v430
        %s433 = sld [smem:[#allocation4 + $0x25]]
        %v434 = vstv %s433
        %v435 = vmul.f32 %v434, %v419
        %v436 = vmul.f32 %v434, %v420
        %v437 = vadd.f32 %v393, %v435
        %v438 = vadd.f32 %v394, %v436
        %s439 = sld [smem:[#allocation4 + $0x26]]
        %v440 = vstv %s439
        %v441 = vmul.f32 %v440, %v419
        %v442 = vmul.f32 %v440, %v420
        %v443 = vadd.f32 %v399, %v441
        %v444 = vadd.f32 %v400, %v442
        %s445 = sld [smem:[#allocation4 + $0x27]]
        %v446 = vstv %s445
        %v447 = vmul.f32 %v446, %v419
        %v448 = vmul.f32 %v446, %v420
        %v449 = vadd.f32 %v405, %v447
        %v450 = vadd.f32 %v406, %v448
        %s451 = sld [smem:[#allocation4 + $0x28]]
        %v452 = vstv %s451
        %v453 = vmul.f32 %v452, %v419
        %v454 = vmul.f32 %v452, %v420
        %v455 = vadd.f32 %v411, %v453
        %v456 = vadd.f32 %v412, %v454
        %s457 = sld [smem:[#allocation4 + $0x29]]
        %v458 = vstv %s457
        %v459 = vmul.f32 %v458, %v419
        %v460 = vmul.f32 %v458, %v420
        %v461 = vadd.f32 %v417, %v459
        %v462 = vadd.f32 %v418, %v460
        %v463 = vld [vmem:[%s211 + $0x6] sm:$0xff]
        %v464 = vld [vmem:[%s211 + $0xe] sm:$0xff]
        %s465 = sld [smem:[#allocation4 + $0x2a]]
        %v466 = vstv %s465
        %v467 = vmul.f32 %v466, %v463
        %v468 = vmul.f32 %v466, %v464
        %v469 = vadd.f32 %v425, %v467
        %v470 = vadd.f32 %v426, %v468
        %s471 = sld [smem:[#allocation4 + $0x2b]]
        %v472 = vstv %s471
        %v473 = vmul.f32 %v472, %v463
        %v474 = vmul.f32 %v472, %v464
        %v475 = vadd.f32 %v431, %v473
        %v476 = vadd.f32 %v432, %v474
        %s477 = sld [smem:[#allocation4 + $0x2c]]
        %v478 = vstv %s477
        %v479 = vmul.f32 %v478, %v463
        %v480 = vmul.f32 %v478, %v464
        %v481 = vadd.f32 %v437, %v479
        %v482 = vadd.f32 %v438, %v480
        %s483 = sld [smem:[#allocation4 + $0x2d]]
        %v484 = vstv %s483
        %v485 = vmul.f32 %v484, %v463
        %v486 = vmul.f32 %v484, %v464
        %v487 = vadd.f32 %v443, %v485
        %v488 = vadd.f32 %v444, %v486
        %s489 = sld [smem:[#allocation4 + $0x2e]]
        %v490 = vstv %s489
        %v491 = vmul.f32 %v490, %v463
        %v492 = vmul.f32 %v490, %v464
        %v493 = vadd.f32 %v449, %v491
        %v494 = vadd.f32 %v450, %v492
        %s495 = sld [smem:[#allocation4 + $0x2f]]
        %v496 = vstv %s495
        %v497 = vmul.f32 %v496, %v463
        %v498 = vmul.f32 %v496, %v464
        %v499 = vadd.f32 %v455, %v497
        %v500 = vadd.f32 %v456, %v498
        %s501 = sld [smem:[#allocation4 + $0x30]]
        %v502 = vstv %s501
        %v503 = vmul.f32 %v502, %v463
        %v504 = vmul.f32 %v502, %v464
        %v505 = vadd.f32 %v461, %v503
        %v506 = vadd.f32 %v462, %v504
        %v507 = vld [vmem:[%s211 + $0x16] sm:$0xff]
        %v508 = vld [vmem:[%s211 + $0x1e] sm:$0xff]
        %s509 = sld [smem:[#allocation4 + $0x31]]
        %v510 = vstv %s509
        %v511 = vmul.f32 %v510, %v507
        %v512 = vmul.f32 %v510, %v508
        %v513 = vadd.f32 %v469, %v511
        %v514 = vadd.f32 %v470, %v512
        %s515 = sld [smem:[#allocation4 + $0x32]]
        %v516 = vstv %s515
        %v517 = vmul.f32 %v516, %v507
        %v518 = vmul.f32 %v516, %v508
        %v519 = vadd.f32 %v475, %v517
        %v520 = vadd.f32 %v476, %v518
        %s521 = sld [smem:[#allocation4 + $0x33]]
        %v522 = vstv %s521
        %v523 = vmul.f32 %v522, %v507
        %v524 = vmul.f32 %v522, %v508
        %v525 = vadd.f32 %v481, %v523
        %v526 = vadd.f32 %v482, %v524
        %s527 = sld [smem:[#allocation4 + $0x34]]
        %v528 = vstv %s527
        %v529 = vmul.f32 %v528, %v507
        %v530 = vmul.f32 %v528, %v508
        %v531 = vadd.f32 %v487, %v529
        %v532 = vadd.f32 %v488, %v530
        %s533 = sld [smem:[#allocation4 + $0x35]]
        %v534 = vstv %s533
        %v535 = vmul.f32 %v534, %v507
        %v536 = vmul.f32 %v534, %v508
        %v537 = vadd.f32 %v493, %v535
        %v538 = vadd.f32 %v494, %v536
        %s539 = sld [smem:[#allocation4 + $0x36]]
        %v540 = vstv %s539
        %v541 = vmul.f32 %v540, %v507
        %v542 = vmul.f32 %v540, %v508
        %v543 = vadd.f32 %v499, %v541
        %v544 = vadd.f32 %v500, %v542
        %s545 = sld [smem:[#allocation4 + $0x37]]
        %v546 = vstv %s545
        %v547 = vmul.f32 %v546, %v507
        %v548 = vmul.f32 %v546, %v508
        %v549 = vadd.f32 %v505, %v547
        %v550 = vadd.f32 %v506, %v548
        %v551 = vld [vmem:[%s211 + $0x17] sm:$0xff]
        %v552 = vld [vmem:[%s211 + $0x1f] sm:$0xff]
        %s553 = sld [smem:[#allocation4 + $0x38]]
        %v554 = vstv %s553
        %v555 = vmul.f32 %v554, %v551
        %v556 = vmul.f32 %v554, %v552
        %v557 = vadd.f32 %v513, %v555
        %v558 = vadd.f32 %v514, %v556
        %s559 = sld [smem:[#allocation4 + $0x39]]
        %v560 = vstv %s559
        %v561 = vmul.f32 %v560, %v551
        %v562 = vmul.f32 %v560, %v552
        %v563 = vadd.f32 %v519, %v561
        %v564 = vadd.f32 %v520, %v562
        %s565 = sld [smem:[#allocation4 + $0x3a]]
        %v566 = vstv %s565
        %v567 = vmul.f32 %v566, %v551
        %v568 = vmul.f32 %v566, %v552
        %v569 = vadd.f32 %v525, %v567
        %v570 = vadd.f32 %v526, %v568
        %s571 = sld [smem:[#allocation4 + $0x3b]]
        %v572 = vstv %s571
        %v573 = vmul.f32 %v572, %v551
        %v574 = vmul.f32 %v572, %v552
        %v575 = vadd.f32 %v531, %v573
        %v576 = vadd.f32 %v532, %v574
        %s577 = sld [smem:[#allocation4 + $0x3c]]
        %v578 = vstv %s577
        %v579 = vmul.f32 %v578, %v551
        %v580 = vmul.f32 %v578, %v552
        %v581 = vadd.f32 %v537, %v579
        %v582 = vadd.f32 %v538, %v580
        %s583 = sld [smem:[#allocation4 + $0x3d]]
        %v584 = vstv %s583
        %v585 = vmul.f32 %v584, %v551
        %v586 = vmul.f32 %v584, %v552
        %v587 = vadd.f32 %v543, %v585
        %v588 = vadd.f32 %v544, %v586
        %s589 = sld [smem:[#allocation4 + $0x3e]]
        %v590 = vstv %s589
        %v591 = vmul.f32 %v590, %v551
        %v592 = vmul.f32 %v590, %v552
        %v593 = vadd.f32 %v549, %v591
        %v594 = vadd.f32 %v550, %v592
        %v595 = vld [vmem:[%s211 + $0x18] sm:$0xff]
        %v596 = vld [vmem:[%s211 + $0x20] sm:$0xff]
        %s597 = sld [smem:[#allocation4 + $0x3f]]
        %v598 = vstv %s597
        %v599 = vmul.f32 %v598, %v595
        %v600 = vmul.f32 %v598, %v596
        %v601 = vadd.f32 %v557, %v599
        %v602 = vadd.f32 %v558, %v600
        %s603 = sld [smem:[#allocation4 + $0x40]]
        %v604 = vstv %s603
        %v605 = vmul.f32 %v604, %v595
        %v606 = vmul.f32 %v604, %v596
        %v607 = vadd.f32 %v563, %v605
        %v608 = vadd.f32 %v564, %v606
        %s609 = sld [smem:[#allocation4 + $0x41]]
        %v610 = vstv %s609
        %v611 = vmul.f32 %v610, %v595
        %v612 = vmul.f32 %v610, %v596
        %v613 = vadd.f32 %v569, %v611
        %v614 = vadd.f32 %v570, %v612
        %s615 = sld [smem:[#allocation4 + $0x42]]
        %v616 = vstv %s615
        %v617 = vmul.f32 %v616, %v595
        %v618 = vmul.f32 %v616, %v596
        %v619 = vadd.f32 %v575, %v617
        %v620 = vadd.f32 %v576, %v618
        %s621 = sld [smem:[#allocation4 + $0x43]]
        %v622 = vstv %s621
        %v623 = vmul.f32 %v622, %v595
        %v624 = vmul.f32 %v622, %v596
        %v625 = vadd.f32 %v581, %v623
        %v626 = vadd.f32 %v582, %v624
        %s627 = sld [smem:[#allocation4 + $0x44]]
        %v628 = vstv %s627
        %v629 = vmul.f32 %v628, %v595
        %v630 = vmul.f32 %v628, %v596
        %v631 = vadd.f32 %v587, %v629
        %v632 = vadd.f32 %v588, %v630
        %s633 = sld [smem:[#allocation4 + $0x45]]
        %v634 = vstv %s633
        %v635 = vmul.f32 %v634, %v595
        %v636 = vmul.f32 %v634, %v596
        %v637 = vadd.f32 %v593, %v635
        %v638 = vadd.f32 %v594, %v636
        %v639 = vld [vmem:[%s211 + $0x19] sm:$0xff]
        %v640 = vld [vmem:[%s211 + $0x21] sm:$0xff]
        %s641 = sld [smem:[#allocation4 + $0x46]]
        %v642 = vstv %s641
        %v643 = vmul.f32 %v642, %v639
        %v644 = vmul.f32 %v642, %v640
        %v645 = vadd.f32 %v601, %v643
        %v646 = vadd.f32 %v602, %v644
        %s647 = sld [smem:[#allocation4 + $0x47]]
        %v648 = vstv %s647
        %v649 = vmul.f32 %v648, %v639
        %v650 = vmul.f32 %v648, %v640
        %v651 = vadd.f32 %v607, %v649
        %v652 = vadd.f32 %v608, %v650
        %s653 = sld [smem:[#allocation4 + $0x48]]
        %v654 = vstv %s653
        %v655 = vmul.f32 %v654, %v639
        %v656 = vmul.f32 %v654, %v640
        %v657 = vadd.f32 %v613, %v655
        %v658 = vadd.f32 %v614, %v656
        %s659 = sld [smem:[#allocation4 + $0x49]]
        %v660 = vstv %s659
        %v661 = vmul.f32 %v660, %v639
        %v662 = vmul.f32 %v660, %v640
        %v663 = vadd.f32 %v619, %v661
        %v664 = vadd.f32 %v620, %v662
        %s665 = sld [smem:[#allocation4 + $0x4a]]
        %v666 = vstv %s665
        %v667 = vmul.f32 %v666, %v639
        %v668 = vmul.f32 %v666, %v640
        %v669 = vadd.f32 %v625, %v667
        %v670 = vadd.f32 %v626, %v668
        %s671 = sld [smem:[#allocation4 + $0x4b]]
        %v672 = vstv %s671
        %v673 = vmul.f32 %v672, %v639
        %v674 = vmul.f32 %v672, %v640
        %v675 = vadd.f32 %v631, %v673
        %v676 = vadd.f32 %v632, %v674
        %s677 = sld [smem:[#allocation4 + $0x4c]]
        %v678 = vstv %s677
        %v679 = vmul.f32 %v678, %v639
        %v680 = vmul.f32 %v678, %v640
        %v681 = vadd.f32 %v637, %v679
        %v682 = vadd.f32 %v638, %v680
        %v683 = vld [vmem:[%s211 + $0x1a] sm:$0xff]
        %v684 = vld [vmem:[%s211 + $0x22] sm:$0xff]
        %s685 = sld [smem:[#allocation4 + $0x4d]]
        %v686 = vstv %s685
        %v687 = vmul.f32 %v686, %v683
        %v688 = vmul.f32 %v686, %v684
        %v689 = vadd.f32 %v645, %v687
        %v690 = vadd.f32 %v646, %v688
        %s691 = sld [smem:[#allocation4 + $0x4e]]
        %v692 = vstv %s691
        %v693 = vmul.f32 %v692, %v683
        %v694 = vmul.f32 %v692, %v684
        %v695 = vadd.f32 %v651, %v693
        %v696 = vadd.f32 %v652, %v694
        %s697 = sld [smem:[#allocation4 + $0x4f]]
        %v698 = vstv %s697
        %v699 = vmul.f32 %v698, %v683
        %v700 = vmul.f32 %v698, %v684
        %v701 = vadd.f32 %v657, %v699
        %v702 = vadd.f32 %v658, %v700
        %s703 = sld [smem:[#allocation4 + $0x50]]
        %v704 = vstv %s703
        %v705 = vmul.f32 %v704, %v683
        %v706 = vmul.f32 %v704, %v684
        %v707 = vadd.f32 %v663, %v705
        %v708 = vadd.f32 %v664, %v706
        %s709 = sld [smem:[#allocation4 + $0x51]]
        %v710 = vstv %s709
        %v711 = vmul.f32 %v710, %v683
        %v712 = vmul.f32 %v710, %v684
        %v713 = vadd.f32 %v669, %v711
        %v714 = vadd.f32 %v670, %v712
        %s715 = sld [smem:[#allocation4 + $0x52]]
        %v716 = vstv %s715
        %v717 = vmul.f32 %v716, %v683
        %v718 = vmul.f32 %v716, %v684
        %v719 = vadd.f32 %v675, %v717
        %v720 = vadd.f32 %v676, %v718
        %s721 = sld [smem:[#allocation4 + $0x53]]
        %v722 = vstv %s721
        %v723 = vmul.f32 %v722, %v683
        %v724 = vmul.f32 %v722, %v684
        %v725 = vadd.f32 %v681, %v723
        %v726 = vadd.f32 %v682, %v724
        %v727 = vld [vmem:[%s211 + $0x1b] sm:$0xff]
        %v728 = vld [vmem:[%s211 + $0x23] sm:$0xff]
        %s729 = sld [smem:[#allocation4 + $0x54]]
        %v730 = vstv %s729
        %v731 = vmul.f32 %v730, %v727
        %v732 = vmul.f32 %v730, %v728
        %v733 = vadd.f32 %v689, %v731
        %v734 = vadd.f32 %v690, %v732
        %s735 = sld [smem:[#allocation4 + $0x55]]
        %v736 = vstv %s735
        %v737 = vmul.f32 %v736, %v727
        %v738 = vmul.f32 %v736, %v728
        %v739 = vadd.f32 %v695, %v737
        %v740 = vadd.f32 %v696, %v738
        %s741 = sld [smem:[#allocation4 + $0x56]]
        %v742 = vstv %s741
        %v743 = vmul.f32 %v742, %v727
        %v744 = vmul.f32 %v742, %v728
        %v745 = vadd.f32 %v701, %v743
        %v746 = vadd.f32 %v702, %v744
        %s747 = sld [smem:[#allocation4 + $0x57]]
        %v748 = vstv %s747
        %v749 = vmul.f32 %v748, %v727
        %v750 = vmul.f32 %v748, %v728
        %v751 = vadd.f32 %v707, %v749
        %v752 = vadd.f32 %v708, %v750
        %s753 = sld [smem:[#allocation4 + $0x58]]
        %v754 = vstv %s753
        %v755 = vmul.f32 %v754, %v727
        %v756 = vmul.f32 %v754, %v728
        %v757 = vadd.f32 %v713, %v755
        %v758 = vadd.f32 %v714, %v756
        %s759 = sld [smem:[#allocation4 + $0x59]]
        %v760 = vstv %s759
        %v761 = vmul.f32 %v760, %v727
        %v762 = vmul.f32 %v760, %v728
        %v763 = vadd.f32 %v719, %v761
        %v764 = vadd.f32 %v720, %v762
        %s765 = sld [smem:[#allocation4 + $0x5a]]
        %v766 = vstv %s765
        %v767 = vmul.f32 %v766, %v727
        %v768 = vmul.f32 %v766, %v728
        %v769 = vadd.f32 %v725, %v767
        %v770 = vadd.f32 %v726, %v768
        %v771 = vld [vmem:[%s211 + $0x1c] sm:$0xff]
        %v772 = vld [vmem:[%s211 + $0x24] sm:$0xff]
        %s773 = sld [smem:[#allocation4 + $0x5b]]
        %v774 = vstv %s773
        %v775 = vmul.f32 %v774, %v771
        %v776 = vmul.f32 %v774, %v772
        %v777 = vadd.f32 %v733, %v775
        %v778 = vadd.f32 %v734, %v776
        %s779 = sld [smem:[#allocation4 + $0x5c]]
        %v780 = vstv %s779
        %v781 = vmul.f32 %v780, %v771
        %v782 = vmul.f32 %v780, %v772
        %v783 = vadd.f32 %v739, %v781
        %v784 = vadd.f32 %v740, %v782
        %s785 = sld [smem:[#allocation4 + $0x5d]]
        %v786 = vstv %s785
        %v787 = vmul.f32 %v786, %v771
        %v788 = vmul.f32 %v786, %v772
        %v789 = vadd.f32 %v745, %v787
        %v790 = vadd.f32 %v746, %v788
        %s791 = sld [smem:[#allocation4 + $0x5e]]
        %v792 = vstv %s791
        %v793 = vmul.f32 %v792, %v771
        %v794 = vmul.f32 %v792, %v772
        %v795 = vadd.f32 %v751, %v793
        %v796 = vadd.f32 %v752, %v794
        %s797 = sld [smem:[#allocation4 + $0x5f]]
        %v798 = vstv %s797
        %v799 = vmul.f32 %v798, %v771
        %v800 = vmul.f32 %v798, %v772
        %v801 = vadd.f32 %v757, %v799
        %v802 = vadd.f32 %v758, %v800
        %s803 = sld [smem:[#allocation4 + $0x60]]
        %v804 = vstv %s803
        %v805 = vmul.f32 %v804, %v771
        %v806 = vmul.f32 %v804, %v772
        %v807 = vadd.f32 %v763, %v805
        %v808 = vadd.f32 %v764, %v806
        %s809 = sld [smem:[#allocation4 + $0x61]]
        %v810 = vstv %s809
        %v811 = vmul.f32 %v810, %v771
        %v812 = vmul.f32 %v810, %v772
        %v813 = vadd.f32 %v769, %v811
        %v814 = vadd.f32 %v770, %v812
        %815 = vst [vmem:[#allocation2 + $0x8] sm:$0xff] 0.0
        %816 = vst [vmem:[#allocation2 + $0x18] sm:$0xff] 0.0
        %817 = vst [vmem:[#allocation2 + $0x28] sm:$0xff] 0.0
        %818 = vst [vmem:[#allocation2 + $0x38] sm:$0xff] 0.0
        %819 = vst [vmem:[#allocation2 + $0x48] sm:$0xff] 0.0
        %820 = vst [vmem:[#allocation2 + $0x58] sm:$0xff] 0.0
        %821 = vst [vmem:[#allocation2 + $0x68] sm:$0xff] 0.0
        %822 = vst [vmem:[#allocation2 + $0x78] sm:$0xff] 0.0
        %823 = vst [vmem:[#allocation2 + $0x88] sm:$0xff] 0.0
        %824 = vst [vmem:[#allocation2 + $0x98] sm:$0xff] 0.0
        %825 = vst [vmem:[#allocation2 + $0xa8] sm:$0xff] 0.0
        %826 = vst [vmem:[#allocation2 + $0xb8] sm:$0xff] 0.0
        %827 = vst [vmem:[#allocation2] sm:$0xff] %v783
        %828 = vst [vmem:[#allocation2 + $0x10] sm:$0xff] %v784
        %s829 = scalar_lea.vmem [#allocation2], 32
        %830 = vst [vmem:[%s829] sm:$0xff] %v789
        %831 = vst [vmem:[%s829 + $0x10] sm:$0xff] %v790
        %s832 = scalar_lea.vmem [#allocation2], 64
        %833 = vst [vmem:[%s832] sm:$0xff] %v795
        %834 = vst [vmem:[%s832 + $0x10] sm:$0xff] %v796
        %s835 = scalar_lea.vmem [#allocation2], 96
        %836 = vst [vmem:[%s835] sm:$0xff] %v801
        %837 = vst [vmem:[%s835 + $0x10] sm:$0xff] %v802
        %s838 = scalar_lea.vmem [#allocation2], 128
        %839 = vst [vmem:[%s838] sm:$0xff] %v807
        %840 = vst [vmem:[%s838 + $0x10] sm:$0xff] %v808
        %s841 = scalar_lea.vmem [#allocation2], 160
        %842 = vst [vmem:[%s841] sm:$0xff] %v813
        %843 = vst [vmem:[%s841 + $0x10] sm:$0xff] %v814
        %v844 = vld [vmem:[#allocation2] sm:$0xff]
        %v845 = vld [vmem:[#allocation2 + $0x8] sm:$0xff]
        %v846 = vld [vmem:[#allocation2 + $0x10] sm:$0xff]
        %v847 = vld [vmem:[#allocation2 + $0x18] sm:$0xff]
        %852 = vrot.lane.b32.xlu0 %v844, 127
        %v853 = vpop.permute.xlu0 %852
        %854 = vrot.lane.b32.xlu0 %v845, 127
        %v855 = vpop.permute.xlu0 %854
        %856 = vrot.lane.b32.xlu0 %v846, 127
        %v857 = vpop.permute.xlu0 %856
        %858 = vrot.lane.b32.xlu0 %v847, 127
        %v859 = vpop.permute.xlu0 %858
        %vm860 = vcmask 1039360
        %v861 = vsel %vm860, %v853, %v855
        %v862 = vsel %vm860, %v857, %v859
        %v865 = vadd.f32 %v777, %v861
        %v866 = vadd.f32 %v778, %v862
        %v867 = vld [vmem:[%s829] sm:$0xff]
        %v868 = vld [vmem:[%s829 + $0x8] sm:$0xff]
        %v869 = vld [vmem:[%s829 + $0x10] sm:$0xff]
        %v870 = vld [vmem:[%s829 + $0x18] sm:$0xff]
        %875 = vrot.lane.b32.xlu0 %v867, 126
        %v876 = vpop.permute.xlu0 %875
        %877 = vrot.lane.b32.xlu0 %v868, 126
        %v878 = vpop.permute.xlu0 %877
        %879 = vrot.lane.b32.xlu0 %v869, 126
        %v880 = vpop.permute.xlu0 %879
        %881 = vrot.lane.b32.xlu0 %v870, 126
        %v882 = vpop.permute.xlu0 %881
        %vm883 = vcmask 1031168
        %v884 = vsel %vm883, %v876, %v878
        %v885 = vsel %vm883, %v880, %v882
        %v888 = vadd.f32 %v865, %v884
        %v889 = vadd.f32 %v866, %v885
        %v890 = vld [vmem:[%s832] sm:$0xff]
        %v891 = vld [vmem:[%s832 + $0x8] sm:$0xff]
        %v892 = vld [vmem:[%s832 + $0x10] sm:$0xff]
        %v893 = vld [vmem:[%s832 + $0x18] sm:$0xff]
        %898 = vrot.lane.b32.xlu0 %v890, 125
        %v899 = vpop.permute.xlu0 %898
        %900 = vrot.lane.b32.xlu0 %v891, 125
        %v901 = vpop.permute.xlu0 %900
        %902 = vrot.lane.b32.xlu0 %v892, 125
        %v903 = vpop.permute.xlu0 %902
        %904 = vrot.lane.b32.xlu0 %v893, 125
        %v905 = vpop.permute.xlu0 %904
        %vm906 = vcmask 1022976
        %v907 = vsel %vm906, %v899, %v901
        %v908 = vsel %vm906, %v903, %v905
        %v911 = vadd.f32 %v888, %v907
        %v912 = vadd.f32 %v889, %v908
        %v913 = vld [vmem:[%s835] sm:$0xff]
        %v914 = vld [vmem:[%s835 + $0x8] sm:$0xff]
        %v915 = vld [vmem:[%s835 + $0x10] sm:$0xff]
        %v916 = vld [vmem:[%s835 + $0x18] sm:$0xff]
        %921 = vrot.lane.b32.xlu0 %v913, 124
        %v922 = vpop.permute.xlu0 %921
        %923 = vrot.lane.b32.xlu0 %v914, 124
        %v924 = vpop.permute.xlu0 %923
        %925 = vrot.lane.b32.xlu0 %v915, 124
        %v926 = vpop.permute.xlu0 %925
        %927 = vrot.lane.b32.xlu0 %v916, 124
        %v928 = vpop.permute.xlu0 %927
        %vm929 = vcmask 1014784
        %v930 = vsel %vm929, %v922, %v924
        %v931 = vsel %vm929, %v926, %v928
        %v934 = vadd.f32 %v911, %v930
        %v935 = vadd.f32 %v912, %v931
        %v936 = vld [vmem:[%s838] sm:$0xff]
        %v937 = vld [vmem:[%s838 + $0x8] sm:$0xff]
        %v938 = vld [vmem:[%s838 + $0x10] sm:$0xff]
        %v939 = vld [vmem:[%s838 + $0x18] sm:$0xff]
        %944 = vrot.lane.b32.xlu0 %v936, 123
        %v945 = vpop.permute.xlu0 %944
        %946 = vrot.lane.b32.xlu0 %v937, 123
        %v947 = vpop.permute.xlu0 %946
        %948 = vrot.lane.b32.xlu0 %v938, 123
        %v949 = vpop.permute.xlu0 %948
        %950 = vrot.lane.b32.xlu0 %v939, 123
        %v951 = vpop.permute.xlu0 %950
        %vm952 = vcmask 1006592
        %v953 = vsel %vm952, %v945, %v947
        %v954 = vsel %vm952, %v949, %v951
        %v957 = vadd.f32 %v934, %v953
        %v958 = vadd.f32 %v935, %v954
        %v959 = vld [vmem:[%s841] sm:$0xff]
        %v960 = vld [vmem:[%s841 + $0x8] sm:$0xff]
        %v961 = vld [vmem:[%s841 + $0x10] sm:$0xff]
        %v962 = vld [vmem:[%s841 + $0x18] sm:$0xff]
        %967 = vrot.lane.b32.xlu0 %v959, 122
        %v968 = vpop.permute.xlu0 %967
        %969 = vrot.lane.b32.xlu0 %v960, 122
        %v970 = vpop.permute.xlu0 %969
        %971 = vrot.lane.b32.xlu0 %v961, 122
        %v972 = vpop.permute.xlu0 %971
        %973 = vrot.lane.b32.xlu0 %v962, 122
        %v974 = vpop.permute.xlu0 %973
        %vm975 = vcmask 998400
        %v976 = vsel %vm975, %v968, %v970
        %v977 = vsel %vm975, %v972, %v974
        %v980 = vadd.f32 %v957, %v976
        %v981 = vadd.f32 %v958, %v977
        %s982 = sld [smem:[#allocation3]]
        %v983 = vstv %s982
        %v984 = vadd.f32 %v980, %v983
        %v985 = vadd.f32 %v981, %v983
        %986 = vst [vmem:[%s202] sm:$0xff] %v984
        %987 = vst [vmem:[%s202 + $0x8] sm:$0xff] %v985
        %s988 = sand.u32 %s111, 1
        %s989 = scalar_lea.sflag [#allocation5], %s988
        %s990 = sand.u32 %s111, 1
        %s991 = smul.addr %s990, 16
        %s992 = scalar_lea.vmem [#allocation7], %s991
        // Predicated region
        $region37: #{_forward.3} parent=31 // pred_check
          %p993 = pneg %p121
        $region38: #{_forward.3} parent=31 // pred_check_branch
          %995 = sbr.rel (%p993) target = $region40
        $region39: #{_forward.3} parent=31 // pred_region
          %s996 = smul.u32 2, %s24
          %s998 = ssub.s32 256, 256
          %999 = vsyncadd %s989, %s998
          %s1000 = smul.addr %s23, 2
          %s1001 = sadd.s32 %s996, %s1000
          %s1002 = smul.addr %s1001, 128
          %s1003 = scalar_lea.hbm %s3, %s1002
          %s1004 = sshll.u32 %s992, 4
          %s1005 = int_to_ptr.vmem [resolvable:$true] %s1004
          %1010 = dma.vmem_to_hbm [thread:$0]  %s1005, 256, %s1003, %s989, 128, 128, 8
        $region40: #{_forward.3} parent=31 // pred_fallthru
          _
      $region32: #{_forward.3} parent=5 // pred_fallthru
        _
      %p1011 = scmp.le.s32.totalorder 2, %s14
      // Predicated region
      $region41: #{_forward.3} parent=5 // pred_check
        %p1012 = pneg %p1011
      $region42: #{_forward.3} parent=5 // pred_check_branch
        %1014 = sbr.rel (%p1012) target = $region44
      $region43: #{_forward.3} parent=5 // pred_region
        %s1015 = ssub.s32 %s14, 2
        // Predicated region
        $region45: #{_forward.3} parent=43 // pred_check
          %p1016 = pneg %p127
        $region46: #{_forward.3} parent=43 // pred_check_branch
          %1018 = sbr.rel (%p1016) target = $region48
        $region47: #{_forward.3} parent=43 // pred_region
          %s1019 = sand.u32 %s112, 1
          %s1020 = scalar_lea.sflag [#allocation5], %s1019
          %s1021 = sand.u32 %s112, 1
          %s1022 = smul.addr %s1021, 16
          %s1023 = scalar_lea.vmem [#allocation7], %s1022
          %1024 = dma.done %s1020, 256
        $region48: #{_forward.3} parent=43 // pred_fallthru
          _
      $region44: #{_forward.3} parent=5 // pred_fallthru
        _
    $region6: #{_forward.3} parent=1 // loop_footer
      %s18 = sadd.s32 1, %s14
    $region7: #{_forward.3} parent=1 // loop_footer_branch
      %13 = sbr.rel target = $region3
    $region8: #{_forward.3} parent=1 // loop_exit
      _
    %1025 = vsyncpa [#allocation5], 1
    %s1026 = scalar_lea.sflag [#allocation5], 1
    %1027 = vsyncpa %s1026, 1
    %1028 = vsyncpa [#allocation6], 1
    %s1029 = scalar_lea.sflag [#allocation6], 1
    %1030 = vsyncpa %s1029, 1

</llo_original>
